<compile_context>
chip_gen: v5e
topology: v5e:2x2
jax: 0.10.0
libtpu: 0.0.40
codegen_flags: <defaults>
</compile_context>

<pallas_src>
import math
from functools import partial

import numpy as np
import jax
import jax.numpy as jnp
from jax import lax
from jax.experimental import pallas as pl
from jax.experimental.pallas import tpu as pltpu

# ---- ARCH constants (synthetic, small, consistent with the module) ----
G = 8                                 # ARCH.G
IMG_ENC_DIM = 64                      # ARCH.IMG_ENC_DIM
PROP_MAP_DIM = 32                     # ARCH.PROP_MAP_DIM
D_IN = IMG_ENC_DIM + PROP_MAP_DIM     # 96
D_PAD = 128                           # lane-aligned K for conv1 (zero-padded)
HID = 128
NUM_GROUPS = 8
Z_DYNA_DIM = 64                       # ARCH.Z_DYNA_DIM -> conv3 outputs 2*Zd = 128
GN_EPS = 1e-5
HW = G * G                            # 64 pixels per image
TB_TARGET = 8                         # images per grid step (cap)


# ---------------- in-kernel helpers (traced inside the Pallas body) ----------------
def _celu(x):
    # CELU(alpha=1): x if x > 0 else exp(x) - 1   (f32 elementwise, VPU/EUP)
    return jnp.where(x > 0, x, jnp.exp(jnp.minimum(x, 0.0)) - 1.0)


def _group_norm(h, tb, gmat, gamma, beta):
    # h: (tb*HW, C).  Per-image stats: sum over the HW rows of each image, then
    # gmat[c', c] = 1/(cg*HW) if same group else 0 broadcasts group means/E[x^2].
    hi = h.reshape(tb, HW, HID)
    s1 = jnp.sum(hi, axis=1)                               # (tb, C)
    s2 = jnp.sum(hi * hi, axis=1)                          # (tb, C)
    mean = jnp.dot(s1, gmat, preferred_element_type=jnp.float32)   # (tb, C)
    ex2 = jnp.dot(s2, gmat, preferred_element_type=jnp.float32)    # (tb, C)
    var = jnp.maximum(ex2 - mean * mean, 0.0)              # clamp before rsqrt
    inv = lax.rsqrt(var + GN_EPS)
    scale = inv * gamma                                    # affine folded in
    shift = beta - mean * scale
    out = hi * scale[:, None, :] + shift[:, None, :]       # 1 mul + 1 add / elem
    return out.reshape(tb * HW, HID)


# ---------------- fused Pallas kernel: TB images (TB*HW rows) per grid step ----------------
def _latent_post_disc_kernel(x_ref, w1_ref, b1_ref, g1_ref, be1_ref,
                             w2_ref, b2_ref, g2_ref, be2_ref,
                             w3_ref, b3_ref, gmat_ref, out_ref, *, tb):
    gmat = gmat_ref[...]
    x = x_ref[...]                                         # (tb*HW, D_PAD), bf16 already

    # conv1 (1x1) + CELU + GroupNorm(8, 128)
    h = jnp.dot(x, w1_ref[...], preferred_element_type=jnp.float32) + b1_ref[...]
    h = _group_norm(_celu(h), tb, gmat, g1_ref[...], be1_ref[...])

    # conv2 (1x1) + CELU + GroupNorm(8, 128)
    h = jnp.dot(h.astype(jnp.bfloat16), w2_ref[...],
                preferred_element_type=jnp.float32) + b2_ref[...]
    h = _group_norm(_celu(h), tb, gmat, g2_ref[...], be2_ref[...])

    # conv3 (1x1) -> (tb*HW, 2*Zd); scale half gets softplus(.) + 1e-4
    p = jnp.dot(h.astype(jnp.bfloat16), w3_ref[...],
                preferred_element_type=jnp.float32) + b3_ref[...]
    sp = jnp.maximum(p, 0.0) + jnp.log1p(jnp.exp(-jnp.abs(p)))
    ch = lax.broadcasted_iota(jnp.int32, p.shape, 1)
    out_ref[...] = jnp.where(ch >= Z_DYNA_DIM, sp + 1e-4, p)   # lane-dense 128-wide store


def _fused_forward(x_rows, w1, b1, g1, be1, w2, b2, g2, be2, w3, b3, gmat, *, tb):
    rows = x_rows.shape[0]
    blk = tb * HW
    n_steps = rows // blk
    vec = lambda b: (0, 0)        # shared params: same block every step (no re-DMA)
    return pl.pallas_call(
        partial(_latent_post_disc_kernel, tb=tb),
        out_shape=jax.ShapeDtypeStruct((rows, 2 * Z_DYNA_DIM), jnp.float32),
        grid=(n_steps,),
        in_specs=[
            pl.BlockSpec((blk, D_PAD), lambda b: (b, 0)),
            pl.BlockSpec((D_PAD, HID), vec),
            pl.BlockSpec((1, HID), vec),
            pl.BlockSpec((1, HID), vec),
            pl.BlockSpec((1, HID), vec),
            pl.BlockSpec((HID, HID), vec),
            pl.BlockSpec((1, HID), vec),
            pl.BlockSpec((1, HID), vec),
            pl.BlockSpec((1, HID), vec),
            pl.BlockSpec((HID, 2 * Z_DYNA_DIM), vec),
            pl.BlockSpec((1, 2 * Z_DYNA_DIM), vec),
            pl.BlockSpec((HID, HID), vec),
        ],
        out_specs=pl.BlockSpec((blk, 2 * Z_DYNA_DIM), lambda b: (b, 0)),
        compiler_params=pltpu.CompilerParams(dimension_semantics=("parallel",)),
    )(x_rows, w1, b1, g1, be1, w2, b2, g2, be2, w3, b3, gmat)


def _choose_tb(B):
    """Images per grid step: amortize per-step overhead but keep >=2 grid steps
    (v7x megacore); prefer even TB so M = TB*64 is a multiple of 128 (v5e MXU)."""
    if B < 2:
        return 1
    tb = min(TB_TARGET, B // 2)
    if tb >= 2:
        tb -= tb % 2
    return max(tb, 1)


# ---------------- one-time parameter prep (hoisted out of the per-call path) ----------------
def prep_params(params):
    (w1, b1, g1, be1), (w2, b2, g2, be2), (w3, b3) = params
    # conv weights: transpose to (Cin, Cout), bf16 for the MXU; pad conv1 K to 128.
    w1p = jnp.zeros((D_PAD, HID), jnp.bfloat16)
    w1p = w1p.at[:D_IN, :].set(jnp.asarray(w1).T.astype(jnp.bfloat16))
    w2p = jnp.asarray(w2).T.astype(jnp.bfloat16)
    w3p = jnp.asarray(w3).T.astype(jnp.bfloat16)
    # group-averaging matrix: gmat[c', c] = 1/(cg*HW) if same group else 0
    cg = HID // NUM_GROUPS
    gid = np.arange(HID) // cg
    gmat = jnp.asarray((gid[:, None] == gid[None, :]).astype(np.float32)
                       / float(cg * HW))
    row = lambda v: jnp.asarray(v).reshape(1, -1).astype(jnp.float32)
    return (w1p, row(b1), row(g1), row(be1),
            w2p, row(b2), row(g2), row(be2),
            w3p, row(b3), gmat)


# ---------------- jitted forward (layout + pad + bf16 cast + split) ----------------
@jax.jit
def latent_post_disc(x, prepped):
    """x: (B, D, G, G) -> (z_dyna_loc, z_dyna_scale): (B, G*G, Z_DYNA_DIM) each."""
    B = x.shape[0]
    tb = _choose_tb(B)
    b_pad = math.ceil(B / tb) * tb

    # channels-last pixels, zero-pad channels 96 -> 128, bf16 for the conv1 MXU pass
    x_pix = x.transpose(0, 2, 3, 1).reshape(B, HW, D_IN)
    x_pix = jnp.pad(x_pix, ((0, b_pad - B), (0, 0), (0, D_PAD - D_IN)))
    x_rows = x_pix.astype(jnp.bfloat16).reshape(b_pad * HW, D_PAD)

    out = _fused_forward(x_rows, *prepped, tb=tb)          # (b_pad*HW, 2*Zd)
    out = out.reshape(b_pad, HW, 2 * Z_DYNA_DIM)[:B]
    z_dyna_loc = out[..., :Z_DYNA_DIM]
    z_dyna_scale = out[..., Z_DYNA_DIM:]
    return z_dyna_loc, z_dyna_scale


# ---------------- params + pure-JAX reference ----------------
def init_params(key):
    def conv_init(k, cin, cout):
        k1, k2 = jax.random.split(k)
        bound = 1.0 / np.sqrt(cin)
        w = jax.random.uniform(k1, (cout, cin), jnp.float32, -bound, bound)
        b = jax.random.uniform(k2, (cout,), jnp.float32, -bound, bound)
        return w, b

    keys = jax.random.split(key, 7)
    w1, b1 = conv_init(keys[0], D_IN, HID)
    g1 = 1.0 + 0.1 * jax.random.normal(keys[1], (HID,), jnp.float32)
    be1 = 0.1 * jax.random.normal(keys[2], (HID,), jnp.float32)
    w2, b2 = conv_init(keys[3], HID, HID)
    g2 = 1.0 + 0.1 * jax.random.normal(keys[4], (HID,), jnp.float32)
    be2 = 0.1 * jax.random.normal(keys[5], (HID,), jnp.float32)
    w3, b3 = conv_init(keys[6], HID, 2 * Z_DYNA_DIM)
    return (w1, b1, g1, be1), (w2, b2, g2, be2), (w3, b3)


def reference(x, params):
    (w1, b1, g1, be1), (w2, b2, g2, be2), (w3, b3) = params
    B = x.shape[0]

    def conv1x1(h, w, b):
        return jnp.einsum('bdhw,cd->bchw', h, w) + b[None, :, None, None]

    def gn(h, gamma, beta):
        Bn, C, Hh, Ww = h.shape
        cg = C // NUM_GROUPS
        hr = h.reshape(Bn, NUM_GROUPS, cg, Hh, Ww)
        mean = hr.mean(axis=(2, 3, 4), keepdims=True)
        var = hr.var(axis=(2, 3, 4), keepdims=True)
        hr = (hr - mean) * lax.rsqrt(var + GN_EPS)
        return (hr.reshape(Bn, C, Hh, Ww) * gamma[None, :, None, None]
                + beta[None, :, None, None])

    h = gn(_celu(conv1x1(x, w1, b1)), g1, be1)
    h = gn(_celu(conv1x1(h, w2, b2)), g2, be2)
    p = conv1x1(h, w3, b3)
    p = p.transpose(0, 2, 3, 1).reshape(B, G * G, -1)
    loc = p[..., :Z_DYNA_DIM]
    scale = jax.nn.softplus(p[..., Z_DYNA_DIM:]) + 1e-4
    return loc, scale


if __name__ == "__main__":
    key = jax.random.PRNGKey(0)
    kx, kp = jax.random.split(key)
    B = 2
    x = jax.random.normal(kx, (B, D_IN, G, G), jnp.float32)
    params = init_params(kp)
    prepped = prep_params(params)          # one-time weight transpose/cast/gmat prep

    loc, scale = latent_post_disc(x, prepped)
    loc, scale = jax.block_until_ready((loc, scale))
    assert loc.shape == (B, G * G, Z_DYNA_DIM)
    assert scale.shape == (B, G * G, Z_DYNA_DIM)

    ref_loc, ref_scale = reference(x, params)
    np.testing.assert_allclose(np.asarray(loc), np.asarray(ref_loc),
                               rtol=5e-2, atol=5e-2)
    np.testing.assert_allclose(np.asarray(scale), np.asarray(ref_scale),
                               rtol=5e-2, atol=5e-2)

    print("KERNEL_OK")
</pallas_src>

<mosaic_0001>
module attributes {stable_mosaic.version = 11 : i64} {
  func.func @_latent_post_disc_kernel(%arg0: i32, %arg1: memref<64x128xbf16, #tpu.memory_space<vmem>>, %arg2: memref<128x128xbf16, #tpu.memory_space<vmem>>, %arg3: memref<1x128xf32, #tpu.memory_space<vmem>>, %arg4: memref<1x128xf32, #tpu.memory_space<vmem>>, %arg5: memref<1x128xf32, #tpu.memory_space<vmem>>, %arg6: memref<128x128xbf16, #tpu.memory_space<vmem>>, %arg7: memref<1x128xf32, #tpu.memory_space<vmem>>, %arg8: memref<1x128xf32, #tpu.memory_space<vmem>>, %arg9: memref<1x128xf32, #tpu.memory_space<vmem>>, %arg10: memref<128x128xbf16, #tpu.memory_space<vmem>>, %arg11: memref<1x128xf32, #tpu.memory_space<vmem>>, %arg12: memref<128x128xf32, #tpu.memory_space<vmem>>, %arg13: memref<64x128xf32, #tpu.memory_space<vmem>>) attributes {dimension_semantics = [#tpu.dimension_semantics<parallel>], iteration_bounds = array<i64: 2>, scalar_prefetch = 0 : i64, scratch_operands = 0 : i64, tpu.core_type = #tpu.core_type<tc>, window_params = [{transform_indices = @transform_0, window_bounds = array<i64: 64, 128>}, {pipeline_mode = #tpu.pipeline_mode<synchronous>, transform_indices = @transform_1, window_bounds = array<i64: 128, 128>}, {pipeline_mode = #tpu.pipeline_mode<synchronous>, transform_indices = @transform_2, window_bounds = array<i64: 1, 128>}, {pipeline_mode = #tpu.pipeline_mode<synchronous>, transform_indices = @transform_3, window_bounds = array<i64: 1, 128>}, {pipeline_mode = #tpu.pipeline_mode<synchronous>, transform_indices = @transform_4, window_bounds = array<i64: 1, 128>}, {pipeline_mode = #tpu.pipeline_mode<synchronous>, transform_indices = @transform_5, window_bounds = array<i64: 128, 128>}, {pipeline_mode = #tpu.pipeline_mode<synchronous>, transform_indices = @transform_6, window_bounds = array<i64: 1, 128>}, {pipeline_mode = #tpu.pipeline_mode<synchronous>, transform_indices = @transform_7, window_bounds = array<i64: 1, 128>}, {pipeline_mode = #tpu.pipeline_mode<synchronous>, transform_indices = @transform_8, window_bounds = array<i64: 1, 128>}, {pipeline_mode = #tpu.pipeline_mode<synchronous>, transform_indices = @transform_9, window_bounds = array<i64: 128, 128>}, {pipeline_mode = #tpu.pipeline_mode<synchronous>, transform_indices = @transform_10, window_bounds = array<i64: 1, 128>}, {pipeline_mode = #tpu.pipeline_mode<synchronous>, transform_indices = @transform_11, window_bounds = array<i64: 128, 128>}, {transform_indices = @transform_12, window_bounds = array<i64: 64, 128>}]} {
    %c0 = arith.constant 0 : index
    %c0_0 = arith.constant 0 : index
    %0 = vector.load %arg12[%c0, %c0_0] : memref<128x128xf32, #tpu.memory_space<vmem>>, vector<128x128xf32>
    %c0_1 = arith.constant 0 : index
    %c0_2 = arith.constant 0 : index
    %1 = vector.load %arg1[%c0_1, %c0_2] : memref<64x128xbf16, #tpu.memory_space<vmem>>, vector<64x128xbf16>
    %c0_3 = arith.constant 0 : index
    %c0_4 = arith.constant 0 : index
    %2 = vector.load %arg2[%c0_3, %c0_4] : memref<128x128xbf16, #tpu.memory_space<vmem>>, vector<128x128xbf16>
    %cst = arith.constant dense<0.000000e+00> : vector<64x128xf32>
    %3 = tpu.matmul %1, %2, %cst {dimension_numbers = #tpu.dot_dimension_numbers<[1], [0], [0], [1], [0, 0, 1, 1], [], []>} : vector<64x128xbf16>, vector<128x128xbf16>, vector<64x128xf32> -> vector<64x128xf32>
    %c0_5 = arith.constant 0 : index
    %c0_6 = arith.constant 0 : index
    %4 = vector.load %arg3[%c0_5, %c0_6] : memref<1x128xf32, #tpu.memory_space<vmem>>, vector<1x128xf32>
    %5 = vector.broadcast %4 : vector<1x128xf32> to vector<64x128xf32>
    %6 = arith.addf %3, %5 : vector<64x128xf32>
    %cst_7 = arith.constant 0.000000e+00 : f32
    %7 = vector.broadcast %cst_7 : f32 to vector<64x128xf32>
    %8 = arith.cmpf ogt, %6, %7 : vector<64x128xf32>
    %cst_8 = arith.constant 0.000000e+00 : f32
    %9 = vector.broadcast %cst_8 : f32 to vector<64x128xf32>
    %10 = arith.minimumf %6, %9 : vector<64x128xf32>
    %11 = math.exp %10 : vector<64x128xf32>
    %cst_9 = arith.constant 1.000000e+00 : f32
    %12 = vector.broadcast %cst_9 : f32 to vector<64x128xf32>
    %13 = arith.subf %11, %12 : vector<64x128xf32>
    %14 = arith.select %8, %6, %13 : vector<64x128xi1>, vector<64x128xf32>
    %c0_10 = arith.constant 0 : index
    %c0_11 = arith.constant 0 : index
    %15 = vector.load %arg4[%c0_10, %c0_11] : memref<1x128xf32, #tpu.memory_space<vmem>>, vector<1x128xf32>
    %c0_12 = arith.constant 0 : index
    %c0_13 = arith.constant 0 : index
    %16 = vector.load %arg5[%c0_12, %c0_13] : memref<1x128xf32, #tpu.memory_space<vmem>>, vector<1x128xf32>
    %17 = vector.shape_cast %14 : vector<64x128xf32> to vector<1x64x128xf32>
    %cst_14 = arith.constant dense<0.000000e+00> : vector<1x128xf32>
    %18 = vector.multi_reduction <add>, %17, %cst_14 [1] : vector<1x64x128xf32> to vector<1x128xf32>
    %19 = arith.mulf %17, %17 : vector<1x64x128xf32>
    %cst_15 = arith.constant dense<0.000000e+00> : vector<1x128xf32>
    %20 = vector.multi_reduction <add>, %19, %cst_15 [1] : vector<1x64x128xf32> to vector<1x128xf32>
    %cst_16 = arith.constant dense<0.000000e+00> : vector<1x128xf32>
    %21 = tpu.matmul %18, %0, %cst_16 {dimension_numbers = #tpu.dot_dimension_numbers<[1], [0], [0], [1], [0, 0, 1, 1], [], []>} : vector<1x128xf32>, vector<128x128xf32>, vector<1x128xf32> -> vector<1x128xf32>
    %cst_17 = arith.constant dense<0.000000e+00> : vector<1x128xf32>
    %22 = tpu.matmul %20, %0, %cst_17 {dimension_numbers = #tpu.dot_dimension_numbers<[1], [0], [0], [1], [0, 0, 1, 1], [], []>} : vector<1x128xf32>, vector<128x128xf32>, vector<1x128xf32> -> vector<1x128xf32>
    %23 = arith.mulf %21, %21 : vector<1x128xf32>
    %24 = arith.subf %22, %23 : vector<1x128xf32>
    %cst_18 = arith.constant 0.000000e+00 : f32
    %25 = vector.broadcast %cst_18 : f32 to vector<1x128xf32>
    %26 = arith.maximumf %24, %25 : vector<1x128xf32>
    %cst_19 = arith.constant 9.99999974E-6 : f32
    %27 = vector.broadcast %cst_19 : f32 to vector<1x128xf32>
    %28 = arith.addf %26, %27 : vector<1x128xf32>
    %29 = math.rsqrt %28 : vector<1x128xf32>
    %30 = arith.mulf %29, %15 : vector<1x128xf32>
    %31 = arith.mulf %21, %30 : vector<1x128xf32>
    %32 = arith.subf %16, %31 : vector<1x128xf32>
    %33 = vector.shape_cast %30 : vector<1x128xf32> to vector<1x1x128xf32>
    %34 = vector.broadcast %33 : vector<1x1x128xf32> to vector<1x64x128xf32>
    %35 = arith.mulf %17, %34 : vector<1x64x128xf32>
    %36 = vector.shape_cast %32 : vector<1x128xf32> to vector<1x1x128xf32>
    %37 = vector.broadcast %36 : vector<1x1x128xf32> to vector<1x64x128xf32>
    %38 = arith.addf %35, %37 : vector<1x64x128xf32>
    %39 = vector.shape_cast %38 : vector<1x64x128xf32> to vector<64x128xf32>
    %40 = arith.truncf %39 : vector<64x128xf32> to vector<64x128xbf16>
    %c0_20 = arith.constant 0 : index
    %c0_21 = arith.constant 0 : index
    %41 = vector.load %arg6[%c0_20, %c0_21] : memref<128x128xbf16, #tpu.memory_space<vmem>>, vector<128x128xbf16>
    %cst_22 = arith.constant dense<0.000000e+00> : vector<64x128xf32>
    %42 = tpu.matmul %40, %41, %cst_22 {dimension_numbers = #tpu.dot_dimension_numbers<[1], [0], [0], [1], [0, 0, 1, 1], [], []>} : vector<64x128xbf16>, vector<128x128xbf16>, vector<64x128xf32> -> vector<64x128xf32>
    %c0_23 = arith.constant 0 : index
    %c0_24 = arith.constant 0 : index
    %43 = vector.load %arg7[%c0_23, %c0_24] : memref<1x128xf32, #tpu.memory_space<vmem>>, vector<1x128xf32>
    %44 = vector.broadcast %43 : vector<1x128xf32> to vector<64x128xf32>
    %45 = arith.addf %42, %44 : vector<64x128xf32>
    %cst_25 = arith.constant 0.000000e+00 : f32
    %46 = vector.broadcast %cst_25 : f32 to vector<64x128xf32>
    %47 = arith.cmpf ogt, %45, %46 : vector<64x128xf32>
    %cst_26 = arith.constant 0.000000e+00 : f32
    %48 = vector.broadcast %cst_26 : f32 to vector<64x128xf32>
    %49 = arith.minimumf %45, %48 : vector<64x128xf32>
    %50 = math.exp %49 : vector<64x128xf32>
    %cst_27 = arith.constant 1.000000e+00 : f32
    %51 = vector.broadcast %cst_27 : f32 to vector<64x128xf32>
    %52 = arith.subf %50, %51 : vector<64x128xf32>
    %53 = arith.select %47, %45, %52 : vector<64x128xi1>, vector<64x128xf32>
    %c0_28 = arith.constant 0 : index
    %c0_29 = arith.constant 0 : index
    %54 = vector.load %arg8[%c0_28, %c0_29] : memref<1x128xf32, #tpu.memory_space<vmem>>, vector<1x128xf32>
    %c0_30 = arith.constant 0 : index
    %c0_31 = arith.constant 0 : index
    %55 = vector.load %arg9[%c0_30, %c0_31] : memref<1x128xf32, #tpu.memory_space<vmem>>, vector<1x128xf32>
    %56 = vector.shape_cast %53 : vector<64x128xf32> to vector<1x64x128xf32>
    %cst_32 = arith.constant dense<0.000000e+00> : vector<1x128xf32>
    %57 = vector.multi_reduction <add>, %56, %cst_32 [1] : vector<1x64x128xf32> to vector<1x128xf32>
    %58 = arith.mulf %56, %56 : vector<1x64x128xf32>
    %cst_33 = arith.constant dense<0.000000e+00> : vector<1x128xf32>
    %59 = vector.multi_reduction <add>, %58, %cst_33 [1] : vector<1x64x128xf32> to vector<1x128xf32>
    %cst_34 = arith.constant dense<0.000000e+00> : vector<1x128xf32>
    %60 = tpu.matmul %57, %0, %cst_34 {dimension_numbers = #tpu.dot_dimension_numbers<[1], [0], [0], [1], [0, 0, 1, 1], [], []>} : vector<1x128xf32>, vector<128x128xf32>, vector<1x128xf32> -> vector<1x128xf32>
    %cst_35 = arith.constant dense<0.000000e+00> : vector<1x128xf32>
    %61 = tpu.matmul %59, %0, %cst_35 {dimension_numbers = #tpu.dot_dimension_numbers<[1], [0], [0], [1], [0, 0, 1, 1], [], []>} : vector<1x128xf32>, vector<128x128xf32>, vector<1x128xf32> -> vector<1x128xf32>
    %62 = arith.mulf %60, %60 : vector<1x128xf32>
    %63 = arith.subf %61, %62 : vector<1x128xf32>
    %cst_36 = arith.constant 0.000000e+00 : f32
    %64 = vector.broadcast %cst_36 : f32 to vector<1x128xf32>
    %65 = arith.maximumf %63, %64 : vector<1x128xf32>
    %cst_37 = arith.constant 9.99999974E-6 : f32
    %66 = vector.broadcast %cst_37 : f32 to vector<1x128xf32>
    %67 = arith.addf %65, %66 : vector<1x128xf32>
    %68 = math.rsqrt %67 : vector<1x128xf32>
    %69 = arith.mulf %68, %54 : vector<1x128xf32>
    %70 = arith.mulf %60, %69 : vector<1x128xf32>
    %71 = arith.subf %55, %70 : vector<1x128xf32>
    %72 = vector.shape_cast %69 : vector<1x128xf32> to vector<1x1x128xf32>
    %73 = vector.broadcast %72 : vector<1x1x128xf32> to vector<1x64x128xf32>
    %74 = arith.mulf %56, %73 : vector<1x64x128xf32>
    %75 = vector.shape_cast %71 : vector<1x128xf32> to vector<1x1x128xf32>
    %76 = vector.broadcast %75 : vector<1x1x128xf32> to vector<1x64x128xf32>
    %77 = arith.addf %74, %76 : vector<1x64x128xf32>
    %78 = vector.shape_cast %77 : vector<1x64x128xf32> to vector<64x128xf32>
    %79 = arith.truncf %78 : vector<64x128xf32> to vector<64x128xbf16>
    %c0_38 = arith.constant 0 : index
    %c0_39 = arith.constant 0 : index
    %80 = vector.load %arg10[%c0_38, %c0_39] : memref<128x128xbf16, #tpu.memory_space<vmem>>, vector<128x128xbf16>
    %cst_40 = arith.constant dense<0.000000e+00> : vector<64x128xf32>
    %81 = tpu.matmul %79, %80, %cst_40 {dimension_numbers = #tpu.dot_dimension_numbers<[1], [0], [0], [1], [0, 0, 1, 1], [], []>} : vector<64x128xbf16>, vector<128x128xbf16>, vector<64x128xf32> -> vector<64x128xf32>
    %c0_41 = arith.constant 0 : index
    %c0_42 = arith.constant 0 : index
    %82 = vector.load %arg11[%c0_41, %c0_42] : memref<1x128xf32, #tpu.memory_space<vmem>>, vector<1x128xf32>
    %83 = vector.broadcast %82 : vector<1x128xf32> to vector<64x128xf32>
    %84 = arith.addf %81, %83 : vector<64x128xf32>
    %cst_43 = arith.constant 0.000000e+00 : f32
    %85 = vector.broadcast %cst_43 : f32 to vector<64x128xf32>
    %86 = arith.maximumf %84, %85 : vector<64x128xf32>
    %87 = math.absf %84 : vector<64x128xf32>
    %cst_44 = arith.constant 0.000000e+00 : f32
    %88 = vector.broadcast %cst_44 : f32 to vector<64x128xf32>
    %89 = arith.subf %88, %87 : vector<64x128xf32>
    %90 = math.exp %89 : vector<64x128xf32>
    %91 = math.log1p %90 : vector<64x128xf32>
    %92 = arith.addf %86, %91 : vector<64x128xf32>
    %93 = tpu.iota {dimensions = array<i32: 1>} : vector<64x128xi32>
    %c64_i32 = arith.constant 64 : i32
    %94 = vector.broadcast %c64_i32 : i32 to vector<64x128xi32>
    %95 = arith.cmpi sge, %93, %94 : vector<64x128xi32>
    %cst_45 = arith.constant 9.99999974E-5 : f32
    %96 = vector.broadcast %cst_45 : f32 to vector<64x128xf32>
    %97 = arith.addf %92, %96 : vector<64x128xf32>
    %98 = arith.select %95, %97, %84 : vector<64x128xi1>, vector<64x128xf32>
    %c0_46 = arith.constant 0 : index
    %c0_47 = arith.constant 0 : index
    %99 = vector.load %arg13[%c0_46, %c0_47] : memref<64x128xf32, #tpu.memory_space<vmem>>, vector<64x128xf32>
    tpu.vector_store %arg13[%c0_46, %c0_47], %98 {strides = array<i32>} : memref<64x128xf32, #tpu.memory_space<vmem>>, vector<64x128xf32>,
    return
  }
  func.func @transform_0(%arg0: i32) -> (i32, i32) {
    %c0_i32 = arith.constant 0 : i32
    %c0_i32_0 = arith.constant 0 : i32
    return %arg0, %c0_i32 : i32, i32
  }
  func.func @transform_1(%arg0: i32) -> (i32, i32) {
    %c0_i32 = arith.constant 0 : i32
    %c0_i32_0 = arith.constant 0 : i32
    %c0_i32_1 = arith.constant 0 : i32
    return %c0_i32, %c0_i32_0 : i32, i32
  }
  func.func @transform_2(%arg0: i32) -> (i32, i32) {
    %c0_i32 = arith.constant 0 : i32
    %c0_i32_0 = arith.constant 0 : i32
    %c0_i32_1 = arith.constant 0 : i32
    return %c0_i32, %c0_i32_0 : i32, i32
  }
  func.func @transform_3(%arg0: i32) -> (i32, i32) {
    %c0_i32 = arith.constant 0 : i32
    %c0_i32_0 = arith.constant 0 : i32
    %c0_i32_1 = arith.constant 0 : i32
    return %c0_i32, %c0_i32_0 : i32, i32
  }
  func.func @transform_4(%arg0: i32) -> (i32, i32) {
    %c0_i32 = arith.constant 0 : i32
    %c0_i32_0 = arith.constant 0 : i32
    %c0_i32_1 = arith.constant 0 : i32
    return %c0_i32, %c0_i32_0 : i32, i32
  }
  func.func @transform_5(%arg0: i32) -> (i32, i32) {
    %c0_i32 = arith.constant 0 : i32
    %c0_i32_0 = arith.constant 0 : i32
    %c0_i32_1 = arith.constant 0 : i32
    return %c0_i32, %c0_i32_0 : i32, i32
  }
  func.func @transform_6(%arg0: i32) -> (i32, i32) {
    %c0_i32 = arith.constant 0 : i32
    %c0_i32_0 = arith.constant 0 : i32
    %c0_i32_1 = arith.constant 0 : i32
    return %c0_i32, %c0_i32_0 : i32, i32
  }
  func.func @transform_7(%arg0: i32) -> (i32, i32) {
    %c0_i32 = arith.constant 0 : i32
    %c0_i32_0 = arith.constant 0 : i32
    %c0_i32_1 = arith.constant 0 : i32
    return %c0_i32, %c0_i32_0 : i32, i32
  }
  func.func @transform_8(%arg0: i32) -> (i32, i32) {
    %c0_i32 = arith.constant 0 : i32
    %c0_i32_0 = arith.constant 0 : i32
    %c0_i32_1 = arith.constant 0 : i32
    return %c0_i32, %c0_i32_0 : i32, i32
  }
  func.func @transform_9(%arg0: i32) -> (i32, i32) {
    %c0_i32 = arith.constant 0 : i32
    %c0_i32_0 = arith.constant 0 : i32
    %c0_i32_1 = arith.constant 0 : i32
    return %c0_i32, %c0_i32_0 : i32, i32
  }
  func.func @transform_10(%arg0: i32) -> (i32, i32) {
    %c0_i32 = arith.constant 0 : i32
    %c0_i32_0 = arith.constant 0 : i32
    %c0_i32_1 = arith.constant 0 : i32
    return %c0_i32, %c0_i32_0 : i32, i32
  }
  func.func @transform_11(%arg0: i32) -> (i32, i32) {
    %c0_i32 = arith.constant 0 : i32
    %c0_i32_0 = arith.constant 0 : i32
    %c0_i32_1 = arith.constant 0 : i32
    return %c0_i32, %c0_i32_0 : i32, i32
  }
  func.func @transform_12(%arg0: i32) -> (i32, i32) {
    %c0_i32 = arith.constant 0 : i32
    %c0_i32_0 = arith.constant 0 : i32
    return %arg0, %c0_i32 : i32, i32
  }
}

</mosaic_0001>

<llo_original>
// kernel: latent_post_disc.1
$region0: #{latent_post_disc.1}
  #allocation0 [shape = 'u32[]', space=smem, size = 0x4, offset = 0x4, fixed_abs, tag = 'smem constant byte address 0x4 - core index']
  #allocation1 [shape = 'u32[72,128]{1,0:T(1,128)}', space=vmem, size = 0x9000, scoped, tag = 'internal scratch']
  %s0 = inlined_call_operand.vmem [shape: bf16[128,128], index: 0, kind: input, shape index: {}]
  %s1 = inlined_call_operand.vmem [shape: bf16[128,128], index: 1, kind: input, shape index: {}]
  %s2 = inlined_call_operand.vmem [shape: f32[1,128], index: 2, kind: input, shape index: {}]
  %s3 = inlined_call_operand.hbm [shape: f32[1,128], index: 3, kind: input, shape index: {}]
  %s4 = inlined_call_operand.vmem [shape: f32[1,128], index: 4, kind: input, shape index: {}]
  %s5 = inlined_call_operand.vmem [shape: bf16[128,128], index: 5, kind: input, shape index: {}]
  %s6 = inlined_call_operand.vmem [shape: f32[1,128], index: 6, kind: input, shape index: {}]
  %s7 = inlined_call_operand.vmem [shape: f32[1,128], index: 7, kind: input, shape index: {}]
  %s8 = inlined_call_operand.vmem [shape: f32[1,128], index: 8, kind: input, shape index: {}]
  %s9 = inlined_call_operand.vmem [shape: bf16[128,128], index: 9, kind: input, shape index: {}]
  %s10 = inlined_call_operand.vmem [shape: f32[1,128], index: 10, kind: input, shape index: {}]
  %s11 = inlined_call_operand.vmem [shape: f32[128,128], index: 11, kind: input, shape index: {}]
  %s12 = inlined_call_operand.vmem [shape: f32[128,128], index: 12, kind: output, shape index: {}]
  %s13 = sld [smem:[#allocation0]]
  $region85: #{latent_post_disc.1} parent=0
    _
  %s15 = ssub.s32 1, %s13
  %s16 = scalar_select 0, %s15, %s13
  $region1: #{latent_post_disc.1} parent=0
    #allocation2 [shape = 'u8[512]{0}', space=vmem, size = 0x400, scoped, tag = 'input window, operand 3, single buffered']
    #allocation3 [shape = 's32[2]{0}', space=sflag, size = 0x8, scoped, tag = 'scoped memory for latent_post_disc.1']
    %17 = vsyncpa [#allocation3], 0
    loop: start=0, step=1, limit=4
    $region2: #{latent_post_disc.1} parent=1 // loop_pre_header
      _
    $region3: #{latent_post_disc.1} parent=1 // loop_header
      %s19 = sphi 0, %s23
      %p20 = scmp.ge.s32.totalorder %s19, 4
      %s29 = sphi 0, %s31
      %s32 = sphi 0, %s29
      %s33 = sphi 0, %s32
      %s49 = sphi 0, %s33
      %s53 = sphi 0, %s53
      %s55 = sphi 0, %s53
      %s56 = sphi 0, %s55
      %s70 = sphi 0, %s56
      %s74 = sphi 0, %s74
      %s76 = sphi 0, %s74
      %s77 = sphi 0, %s76
      %s91 = sphi 0, %s77
      %s95 = sphi 0, %s95
      %s97 = sphi 0, %s95
      %s98 = sphi 0, %s97
      %s112 = sphi 0, %s98
      %s116 = sphi 0, %s116
      %s118 = sphi 0, %s116
      %s119 = sphi 0, %s118
      %s133 = sphi 0, %s119
      %s137 = sphi 0, %s137
      %s139 = sphi 0, %s137
      %s140 = sphi 0, %s139
      %s154 = sphi 0, %s140
      %s158 = sphi 0, %s158
      %s160 = sphi 0, %s158
      %s161 = sphi 0, %s160
      %s175 = sphi 0, %s161
      %s179 = sphi 0, %s179
      %s181 = sphi 0, %s179
      %s182 = sphi 0, %s181
      %s196 = sphi 0, %s182
      %s200 = sphi 0, %s200
      %s202 = sphi 0, %s200
      %s203 = sphi 0, %s202
      %s217 = sphi 0, %s203
      %s221 = sphi 0, %s221
      %s223 = sphi 0, %s221
      %s224 = sphi 0, %s223
      %s238 = sphi 0, %s224
      %s242 = sphi 0, %s242
      %s244 = sphi 0, %s242
      %s245 = sphi 0, %s244
      %s259 = sphi 0, %s245
      %s263 = sphi 0, %s263
      %s265 = sphi 0, %s263
      %s266 = sphi 0, %s265
      %s280 = sphi 0, %s266
      %s286 = sphi 0, %s288
      %s289 = sphi 0, %s286
      %s290 = sphi 0, %s289
      %s306 = sphi 0, %s290
    $region4: #{latent_post_disc.1} parent=1 // loop_header_branch
      %22 = sbr.rel (%p20) target = $region8
    $region5: #{latent_post_disc.1} parent=1 // loop_body
      %s24 = ssub.s32 %s19, 1
      %s25 = ssub.s32 %s19, 2
      %s26 = sadd.s32 %s19, 1
      %s27 = ssub.s32 %s19, %s26
      %p28 = scmp.eq.s32.totalorder %s27, 0
      %s30 = sadd.s32 %s29, 1
      %s31 = scalar_select %p28, %s29, %s30
      %p34 = pneg %p28
      %p35 = scmp.eq.s32.totalorder %s19, 1
      %p36 = por %p34, %p35
      %p37 = scmp.ne.s32.totalorder %s29, %s32
      %p38 = scmp.eq.s32.totalorder %s19, 0
      %p39 = por %p37, %p38
      %p40 = scmp.ne.s32.totalorder %s29, %s32
      %p41 = scmp.eq.s32.totalorder %s24, 1
      %p42 = por %p40, %p41
      %p43 = scmp.ne.s32.totalorder %s32, %s33
      %p44 = scmp.eq.s32.totalorder %s24, 0
      %p45 = por %p43, %p44
      %p46 = scmp.ne.s32.totalorder %s32, %s33
      %p47 = scmp.eq.s32.totalorder %s25, 1
      %p48 = por %p46, %p47
      %p50 = scmp.ne.s32.totalorder %s33, %s49
      %p51 = scmp.eq.s32.totalorder %s25, 0
      %p52 = por %p50, %p51
      %s54 = sadd.s32 %s53, 1
      %p57 = scmp.eq.s32.totalorder %s19, 1
      %p58 = scmp.ne.s32.totalorder %s53, %s55
      %p59 = scmp.eq.s32.totalorder %s19, 0
      %p60 = por %p58, %p59
      %p61 = scmp.ne.s32.totalorder %s53, %s55
      %p62 = scmp.eq.s32.totalorder %s24, 1
      %p63 = por %p61, %p62
      %p64 = scmp.ne.s32.totalorder %s55, %s56
      %p65 = scmp.eq.s32.totalorder %s24, 0
      %p66 = por %p64, %p65
      %p67 = scmp.ne.s32.totalorder %s55, %s56
      %p68 = scmp.eq.s32.totalorder %s25, 1
      %p69 = por %p67, %p68
      %p71 = scmp.ne.s32.totalorder %s56, %s70
      %p72 = scmp.eq.s32.totalorder %s25, 0
      %p73 = por %p71, %p72
      %s75 = sadd.s32 %s74, 1
      %p78 = scmp.eq.s32.totalorder %s19, 1
      %p79 = scmp.ne.s32.totalorder %s74, %s76
      %p80 = scmp.eq.s32.totalorder %s19, 0
      %p81 = por %p79, %p80
      %p82 = scmp.ne.s32.totalorder %s74, %s76
      %p83 = scmp.eq.s32.totalorder %s24, 1
      %p84 = por %p82, %p83
      %p85 = scmp.ne.s32.totalorder %s76, %s77
      %p86 = scmp.eq.s32.totalorder %s24, 0
      %p87 = por %p85, %p86
      %p88 = scmp.ne.s32.totalorder %s76, %s77
      %p89 = scmp.eq.s32.totalorder %s25, 1
      %p90 = por %p88, %p89
      %p92 = scmp.ne.s32.totalorder %s77, %s91
      %p93 = scmp.eq.s32.totalorder %s25, 0
      %p94 = por %p92, %p93
      %s96 = sadd.s32 %s95, 1
      %p99 = scmp.eq.s32.totalorder %s19, 1
      %p100 = scmp.ne.s32.totalorder %s95, %s97
      %p101 = scmp.eq.s32.totalorder %s19, 0
      %p102 = por %p100, %p101
      %p103 = scmp.ne.s32.totalorder %s95, %s97
      %p104 = scmp.eq.s32.totalorder %s24, 1
      %p105 = por %p103, %p104
      %p106 = scmp.ne.s32.totalorder %s97, %s98
      %p107 = scmp.eq.s32.totalorder %s24, 0
      %p108 = por %p106, %p107
      %p109 = scmp.ne.s32.totalorder %s97, %s98
      %p110 = scmp.eq.s32.totalorder %s25, 1
      %p111 = por %p109, %p110
      %p113 = scmp.ne.s32.totalorder %s98, %s112
      %p114 = scmp.eq.s32.totalorder %s25, 0
      %p115 = por %p113, %p114
      %s117 = sadd.s32 %s116, 1
      %p120 = scmp.eq.s32.totalorder %s19, 1
      %p121 = scmp.ne.s32.totalorder %s116, %s118
      %p122 = scmp.eq.s32.totalorder %s19, 0
      %p123 = por %p121, %p122
      %p124 = scmp.ne.s32.totalorder %s116, %s118
      %p125 = scmp.eq.s32.totalorder %s24, 1
      %p126 = por %p124, %p125
      %p127 = scmp.ne.s32.totalorder %s118, %s119
      %p128 = scmp.eq.s32.totalorder %s24, 0
      %p129 = por %p127, %p128
      %p130 = scmp.ne.s32.totalorder %s118, %s119
      %p131 = scmp.eq.s32.totalorder %s25, 1
      %p132 = por %p130, %p131
      %p134 = scmp.ne.s32.totalorder %s119, %s133
      %p135 = scmp.eq.s32.totalorder %s25, 0
      %p136 = por %p134, %p135
      %s138 = sadd.s32 %s137, 1
      %p141 = scmp.eq.s32.totalorder %s19, 1
      %p142 = scmp.ne.s32.totalorder %s137, %s139
      %p143 = scmp.eq.s32.totalorder %s19, 0
      %p144 = por %p142, %p143
      %p145 = scmp.ne.s32.totalorder %s137, %s139
      %p146 = scmp.eq.s32.totalorder %s24, 1
      %p147 = por %p145, %p146
      %p148 = scmp.ne.s32.totalorder %s139, %s140
      %p149 = scmp.eq.s32.totalorder %s24, 0
      %p150 = por %p148, %p149
      %p151 = scmp.ne.s32.totalorder %s139, %s140
      %p152 = scmp.eq.s32.totalorder %s25, 1
      %p153 = por %p151, %p152
      %p155 = scmp.ne.s32.totalorder %s140, %s154
      %p156 = scmp.eq.s32.totalorder %s25, 0
      %p157 = por %p155, %p156
      %s159 = sadd.s32 %s158, 1
      %p162 = scmp.eq.s32.totalorder %s19, 1
      %p163 = scmp.ne.s32.totalorder %s158, %s160
      %p164 = scmp.eq.s32.totalorder %s19, 0
      %p165 = por %p163, %p164
      %p166 = scmp.ne.s32.totalorder %s158, %s160
      %p167 = scmp.eq.s32.totalorder %s24, 1
      %p168 = por %p166, %p167
      %p169 = scmp.ne.s32.totalorder %s160, %s161
      %p170 = scmp.eq.s32.totalorder %s24, 0
      %p171 = por %p169, %p170
      %p172 = scmp.ne.s32.totalorder %s160, %s161
      %p173 = scmp.eq.s32.totalorder %s25, 1
      %p174 = por %p172, %p173
      %p176 = scmp.ne.s32.totalorder %s161, %s175
      %p177 = scmp.eq.s32.totalorder %s25, 0
      %p178 = por %p176, %p177
      %s180 = sadd.s32 %s179, 1
      %p183 = scmp.eq.s32.totalorder %s19, 1
      %p184 = scmp.ne.s32.totalorder %s179, %s181
      %p185 = scmp.eq.s32.totalorder %s19, 0
      %p186 = por %p184, %p185
      %p187 = scmp.ne.s32.totalorder %s179, %s181
      %p188 = scmp.eq.s32.totalorder %s24, 1
      %p189 = por %p187, %p188
      %p190 = scmp.ne.s32.totalorder %s181, %s182
      %p191 = scmp.eq.s32.totalorder %s24, 0
      %p192 = por %p190, %p191
      %p193 = scmp.ne.s32.totalorder %s181, %s182
      %p194 = scmp.eq.s32.totalorder %s25, 1
      %p195 = por %p193, %p194
      %p197 = scmp.ne.s32.totalorder %s182, %s196
      %p198 = scmp.eq.s32.totalorder %s25, 0
      %p199 = por %p197, %p198
      %s201 = sadd.s32 %s200, 1
      %p204 = scmp.eq.s32.totalorder %s19, 1
      %p205 = scmp.ne.s32.totalorder %s200, %s202
      %p206 = scmp.eq.s32.totalorder %s19, 0
      %p207 = por %p205, %p206
      %p208 = scmp.ne.s32.totalorder %s200, %s202
      %p209 = scmp.eq.s32.totalorder %s24, 1
      %p210 = por %p208, %p209
      %p211 = scmp.ne.s32.totalorder %s202, %s203
      %p212 = scmp.eq.s32.totalorder %s24, 0
      %p213 = por %p211, %p212
      %p214 = scmp.ne.s32.totalorder %s202, %s203
      %p215 = scmp.eq.s32.totalorder %s25, 1
      %p216 = por %p214, %p215
      %p218 = scmp.ne.s32.totalorder %s203, %s217
      %p219 = scmp.eq.s32.totalorder %s25, 0
      %p220 = por %p218, %p219
      %s222 = sadd.s32 %s221, 1
      %p225 = scmp.eq.s32.totalorder %s19, 1
      %p226 = scmp.ne.s32.totalorder %s221, %s223
      %p227 = scmp.eq.s32.totalorder %s19, 0
      %p228 = por %p226, %p227
      %p229 = scmp.ne.s32.totalorder %s221, %s223
      %p230 = scmp.eq.s32.totalorder %s24, 1
      %p231 = por %p229, %p230
      %p232 = scmp.ne.s32.totalorder %s223, %s224
      %p233 = scmp.eq.s32.totalorder %s24, 0
      %p234 = por %p232, %p233
      %p235 = scmp.ne.s32.totalorder %s223, %s224
      %p236 = scmp.eq.s32.totalorder %s25, 1
      %p237 = por %p235, %p236
      %p239 = scmp.ne.s32.totalorder %s224, %s238
      %p240 = scmp.eq.s32.totalorder %s25, 0
      %p241 = por %p239, %p240
      %s243 = sadd.s32 %s242, 1
      %p246 = scmp.eq.s32.totalorder %s19, 1
      %p247 = scmp.ne.s32.totalorder %s242, %s244
      %p248 = scmp.eq.s32.totalorder %s19, 0
      %p249 = por %p247, %p248
      %p250 = scmp.ne.s32.totalorder %s242, %s244
      %p251 = scmp.eq.s32.totalorder %s24, 1
      %p252 = por %p250, %p251
      %p253 = scmp.ne.s32.totalorder %s244, %s245
      %p254 = scmp.eq.s32.totalorder %s24, 0
      %p255 = por %p253, %p254
      %p256 = scmp.ne.s32.totalorder %s244, %s245
      %p257 = scmp.eq.s32.totalorder %s25, 1
      %p258 = por %p256, %p257
      %p260 = scmp.ne.s32.totalorder %s245, %s259
      %p261 = scmp.eq.s32.totalorder %s25, 0
      %p262 = por %p260, %p261
      %s264 = sadd.s32 %s263, 1
      %p267 = scmp.eq.s32.totalorder %s19, 1
      %p268 = scmp.ne.s32.totalorder %s263, %s265
      %p269 = scmp.eq.s32.totalorder %s19, 0
      %p270 = por %p268, %p269
      %p271 = scmp.ne.s32.totalorder %s263, %s265
      %p272 = scmp.eq.s32.totalorder %s24, 1
      %p273 = por %p271, %p272
      %p274 = scmp.ne.s32.totalorder %s265, %s266
      %p275 = scmp.eq.s32.totalorder %s24, 0
      %p276 = por %p274, %p275
      %p277 = scmp.ne.s32.totalorder %s265, %s266
      %p278 = scmp.eq.s32.totalorder %s25, 1
      %p279 = por %p277, %p278
      %p281 = scmp.ne.s32.totalorder %s266, %s280
      %p282 = scmp.eq.s32.totalorder %s25, 0
      %p283 = por %p281, %p282
      %s284 = ssub.s32 %s19, %s26
      %p285 = scmp.eq.s32.totalorder %s284, 0
      %s287 = sadd.s32 %s286, 1
      %s288 = scalar_select %p285, %s286, %s287
      %p291 = pneg %p285
      %p292 = scmp.eq.s32.totalorder %s19, 1
      %p293 = por %p291, %p292
      %p294 = scmp.ne.s32.totalorder %s286, %s289
      %p295 = scmp.eq.s32.totalorder %s19, 0
      %p296 = por %p294, %p295
      %p297 = scmp.ne.s32.totalorder %s286, %s289
      %p298 = scmp.eq.s32.totalorder %s24, 1
      %p299 = por %p297, %p298
      %p300 = scmp.ne.s32.totalorder %s289, %s290
      %p301 = scmp.eq.s32.totalorder %s24, 0
      %p302 = por %p300, %p301
      %p303 = scmp.ne.s32.totalorder %s289, %s290
      %p304 = scmp.eq.s32.totalorder %s25, 1
      %p305 = por %p303, %p304
      %p307 = scmp.ne.s32.totalorder %s290, %s306
      %p308 = scmp.eq.s32.totalorder %s25, 0
      %p309 = por %p307, %p308
      %p310 = scmp.le.s32.totalorder 1, %s19
      %p311 = scmp.lt.s32.totalorder %s19, 3
      %p312 = pnand %p310, %p311
      %p313 = pneg %p312
      // Predicated region
      $region9: #{latent_post_disc.1} parent=5 // pred_check
        _
      $region10: #{latent_post_disc.1} parent=5 // pred_check_branch
        %315 = sbr.rel (%p312) target = $region12
      $region11: #{latent_post_disc.1} parent=5 // pred_region
        %s316 = ssub.s32 %s19, 1
        // Predicated region
        $region13: #{latent_post_disc.1} parent=11 // pred_check
          %p317 = pneg %p66
        $region14: #{latent_post_disc.1} parent=11 // pred_check_branch
          %319 = sbr.rel (%p317) target = $region16
        $region15: #{latent_post_disc.1} parent=11 // pred_region
          _
        $region16: #{latent_post_disc.1} parent=11 // pred_fallthru
          _
        // Predicated region
        $region17: #{latent_post_disc.1} parent=11 // pred_check
          %p320 = pneg %p87
        $region18: #{latent_post_disc.1} parent=11 // pred_check_branch
          %322 = sbr.rel (%p320) target = $region20
        $region19: #{latent_post_disc.1} parent=11 // pred_region
          _
        $region20: #{latent_post_disc.1} parent=11 // pred_fallthru
          _
        // Predicated region
        $region21: #{latent_post_disc.1} parent=11 // pred_check
          %p323 = pneg %p108
        $region22: #{latent_post_disc.1} parent=11 // pred_check_branch
          %325 = sbr.rel (%p323) target = $region24
        $region23: #{latent_post_disc.1} parent=11 // pred_region
          %327 = vsyncadd [#allocation3], 0
          %s329 = sshll.u32 %s3, 4
          %s330 = int_to_ptr.hbm [resolvable:$true] %s329
          %s331 = sshll.u32 [#allocation2], 4
          %s332 = int_to_ptr.vmem [resolvable:$true] %s331
          %334 = dma.hbm_to_vmem [thread:$0]  %s330, 16, %s332, [#allocation3]
        $region24: #{latent_post_disc.1} parent=11 // pred_fallthru
          _
        // Predicated region
        $region25: #{latent_post_disc.1} parent=11 // pred_check
          %p335 = pneg %p129
        $region26: #{latent_post_disc.1} parent=11 // pred_check_branch
          %337 = sbr.rel (%p335) target = $region28
        $region27: #{latent_post_disc.1} parent=11 // pred_region
          _
        $region28: #{latent_post_disc.1} parent=11 // pred_fallthru
          _
        // Predicated region
        $region29: #{latent_post_disc.1} parent=11 // pred_check
          %p338 = pneg %p150
        $region30: #{latent_post_disc.1} parent=11 // pred_check_branch
          %340 = sbr.rel (%p338) target = $region32
        $region31: #{latent_post_disc.1} parent=11 // pred_region
          _
        $region32: #{latent_post_disc.1} parent=11 // pred_fallthru
          _
        // Predicated region
        $region33: #{latent_post_disc.1} parent=11 // pred_check
          %p341 = pneg %p171
        $region34: #{latent_post_disc.1} parent=11 // pred_check_branch
          %343 = sbr.rel (%p341) target = $region36
        $region35: #{latent_post_disc.1} parent=11 // pred_region
          _
        $region36: #{latent_post_disc.1} parent=11 // pred_fallthru
          _
        // Predicated region
        $region37: #{latent_post_disc.1} parent=11 // pred_check
          %p344 = pneg %p192
        $region38: #{latent_post_disc.1} parent=11 // pred_check_branch
          %346 = sbr.rel (%p344) target = $region40
        $region39: #{latent_post_disc.1} parent=11 // pred_region
          _
        $region40: #{latent_post_disc.1} parent=11 // pred_fallthru
          _
        // Predicated region
        $region41: #{latent_post_disc.1} parent=11 // pred_check
          %p347 = pneg %p213
        $region42: #{latent_post_disc.1} parent=11 // pred_check_branch
          %349 = sbr.rel (%p347) target = $region44
        $region43: #{latent_post_disc.1} parent=11 // pred_region
          _
        $region44: #{latent_post_disc.1} parent=11 // pred_fallthru
          _
        // Predicated region
        $region45: #{latent_post_disc.1} parent=11 // pred_check
          %p350 = pneg %p234
        $region46: #{latent_post_disc.1} parent=11 // pred_check_branch
          %352 = sbr.rel (%p350) target = $region48
        $region47: #{latent_post_disc.1} parent=11 // pred_region
          _
        $region48: #{latent_post_disc.1} parent=11 // pred_fallthru
          _
        // Predicated region
        $region49: #{latent_post_disc.1} parent=11 // pred_check
          %p353 = pneg %p255
        $region50: #{latent_post_disc.1} parent=11 // pred_check_branch
          %355 = sbr.rel (%p353) target = $region52
        $region51: #{latent_post_disc.1} parent=11 // pred_region
          _
        $region52: #{latent_post_disc.1} parent=11 // pred_fallthru
          _
        // Predicated region
        $region53: #{latent_post_disc.1} parent=11 // pred_check
          %p356 = pneg %p276
        $region54: #{latent_post_disc.1} parent=11 // pred_check_branch
          %358 = sbr.rel (%p356) target = $region56
        $region55: #{latent_post_disc.1} parent=11 // pred_region
          _
        $region56: #{latent_post_disc.1} parent=11 // pred_fallthru
          _
      $region12: #{latent_post_disc.1} parent=5 // pred_fallthru
        _
      %p359 = scmp.lt.s32.totalorder %s19, 2
      // Predicated region
      $region57: #{latent_post_disc.1} parent=5 // pred_check
        %p360 = pneg %p359
      $region58: #{latent_post_disc.1} parent=5 // pred_check_branch
        %362 = sbr.rel (%p360) target = $region60
      $region59: #{latent_post_disc.1} parent=5 // pred_region
        // Predicated region
        $region61: #{latent_post_disc.1} parent=59 // pred_check
          %p363 = pneg %p39
        $region62: #{latent_post_disc.1} parent=59 // pred_check_branch
          %365 = sbr.rel (%p363) target = $region64
        $region63: #{latent_post_disc.1} parent=59 // pred_region
          %s366 = smul.u32 8, %s19
          %p367 = scmp.lt.s32.totalorder %s366, 15
          %s368 = scalar_select %p367, %s366, 15
          %s369 = smul.addr %s368, 4
          %s370 = scalar_lea.vmem %s0, %s369
          %s371 = smul.u32 8, %s19
        $region64: #{latent_post_disc.1} parent=59 // pred_fallthru
          _
      $region60: #{latent_post_disc.1} parent=5 // pred_fallthru
        _
      %p372 = scmp.le.s32.totalorder 1, %s19
      %p373 = scmp.lt.s32.totalorder %s19, 3
      %p374 = pnand %p372, %p373
      %p375 = pneg %p374
      // Predicated region
      $region65: #{latent_post_disc.1} parent=5 // pred_check
        _
      $region66: #{latent_post_disc.1} parent=5 // pred_check_branch
        %377 = sbr.rel (%p374) target = $region68
      $region67: #{latent_post_disc.1} parent=5 // pred_region
        %s378 = ssub.s32 %s19, 1
        // Predicated region
        $region69: #{latent_post_disc.1} parent=67 // pred_check
          %p379 = pneg %p108
        $region70: #{latent_post_disc.1} parent=67 // pred_check_branch
          %381 = sbr.rel (%p379) target = $region72
        $region71: #{latent_post_disc.1} parent=67 // pred_region
          %383 = dma.done [#allocation3], 16
        $region72: #{latent_post_disc.1} parent=67 // pred_fallthru
          _
        %s384 = smul.u32 8, %s24
        %p385 = scmp.lt.s32.totalorder %s384, 15
        %s386 = scalar_select %p385, %s384, 15
        %s387 = smul.addr %s386, 4
        %s388 = scalar_lea.vmem %s0, %s387
        %p389 = pneg %p45
        %p390 = pneg %p42
        %p391 = pneg %p66
        %p392 = pneg %p63
        %p393 = pneg %p87
        %p394 = pneg %p84
        %p395 = pneg %p108
        %p396 = pneg %p105
        %p397 = pneg %p129
        %p398 = pneg %p126
        %p399 = pneg %p150
        %p400 = pneg %p147
        %p401 = pneg %p171
        %p402 = pneg %p168
        %p403 = pneg %p192
        %p404 = pneg %p189
        %p405 = pneg %p213
        %p406 = pneg %p210
        %p407 = pneg %p234
        %p408 = pneg %p231
        %p409 = pneg %p255
        %p410 = pneg %p252
        %p411 = pneg %p276
        %p412 = pneg %p273
        %p413 = pneg %p302
        %p414 = pneg %p299
        %s415 = smul.u32 8, %s24
        %p416 = scmp.lt.s32.totalorder %s415, 15
        %s417 = scalar_select %p416, %s415, 15
        %s418 = smul.addr %s417, 8
        %s419 = scalar_lea.vmem %s12, %s418
        %s420 = smul.u32 8, %s24
        %p421 = scmp.lt.s32.totalorder %s420, 15
        %s422 = scalar_select %p421, %s420, 15
        %s423 = smul.addr %s422, 4
        %s424 = scalar_lea.vmem %s0, %s423
        %s425 = smul.u32 8, %s24
        %s426 = smul.u32 8, %s24
        %p427 = scmp.lt.s32.totalorder %s426, 15
        %s428 = scalar_select %p427, %s426, 15
        %s429 = smul.addr %s428, 8
        %s430 = scalar_lea.vmem %s12, %s429
        %s431 = smul.u32 8, %s24
        %v432 = vld [vmem:[%s11] sm:$0xff]
        %v433 = vld [vmem:[%s11 + $0x8] sm:$0xff]
        %v434 = vld [vmem:[%s11 + $0x10] sm:$0xff]
        %v435 = vld [vmem:[%s11 + $0x18] sm:$0xff]
        %v436 = vld [vmem:[%s11 + $0x20] sm:$0xff]
        %v437 = vld [vmem:[%s11 + $0x28] sm:$0xff]
        %v438 = vld [vmem:[%s11 + $0x30] sm:$0xff]
        %v439 = vld [vmem:[%s11 + $0x38] sm:$0xff]
        %v440 = vld [vmem:[%s11 + $0x40] sm:$0xff]
        %v441 = vld [vmem:[%s11 + $0x48] sm:$0xff]
        %v442 = vld [vmem:[%s11 + $0x50] sm:$0xff]
        %v443 = vld [vmem:[%s11 + $0x58] sm:$0xff]
        %v444 = vld [vmem:[%s11 + $0x60] sm:$0xff]
        %v445 = vld [vmem:[%s11 + $0x68] sm:$0xff]
        %v446 = vld [vmem:[%s11 + $0x70] sm:$0xff]
        %v447 = vld [vmem:[%s11 + $0x78] sm:$0xff]
        %v448 = vld [vmem:[%s424] sm:$0xf]
        %v449 = vld [vmem:[%s424 + $0x4] sm:$0xf]
        %v450 = vld [vmem:[%s424 + $0x8] sm:$0xf]
        %v451 = vld [vmem:[%s424 + $0xc] sm:$0xf]
        %v452 = vld [vmem:[%s424 + $0x10] sm:$0xf]
        %v453 = vld [vmem:[%s424 + $0x14] sm:$0xf]
        %v454 = vld [vmem:[%s424 + $0x18] sm:$0xf]
        %v455 = vld [vmem:[%s424 + $0x1c] sm:$0xf]
        %v456 = vld [vmem:[%s1] sm:$0xf]
        %v457 = vld [vmem:[%s1 + $0x4] sm:$0xf]
        %v458 = vld [vmem:[%s1 + $0x8] sm:$0xf]
        %v459 = vld [vmem:[%s1 + $0xc] sm:$0xf]
        %v460 = vld [vmem:[%s1 + $0x10] sm:$0xf]
        %v461 = vld [vmem:[%s1 + $0x14] sm:$0xf]
        %v462 = vld [vmem:[%s1 + $0x18] sm:$0xf]
        %v463 = vld [vmem:[%s1 + $0x1c] sm:$0xf]
        %v464 = vld [vmem:[%s1 + $0x20] sm:$0xf]
        %v465 = vld [vmem:[%s1 + $0x24] sm:$0xf]
        %v466 = vld [vmem:[%s1 + $0x28] sm:$0xf]
        %v467 = vld [vmem:[%s1 + $0x2c] sm:$0xf]
        %v468 = vld [vmem:[%s1 + $0x30] sm:$0xf]
        %v469 = vld [vmem:[%s1 + $0x34] sm:$0xf]
        %v470 = vld [vmem:[%s1 + $0x38] sm:$0xf]
        %v471 = vld [vmem:[%s1 + $0x3c] sm:$0xf]
        %v472 = vld [vmem:[%s2] sm:$0x1]
        %v474 = vperm.slane %v472, 0
        %v484 = vunpack.c.l.b16 %v448
        %v485 = vunpack.c.l.b16 %v449
        %v486 = vunpack.c.l.b16 %v450
        %v487 = vunpack.c.l.b16 %v451
        %v488 = vunpack.c.l.b16 %v452
        %v489 = vunpack.c.l.b16 %v453
        %v490 = vunpack.c.l.b16 %v454
        %v491 = vunpack.c.l.b16 %v455
        %v492 = vpack.c.b16 %v485, %v484
        %v493 = vpack.c.b16 %v487, %v486
        %v494 = vpack.c.b16 %v489, %v488
        %v495 = vpack.c.b16 %v491, %v490
        %v516 = vunpack.c.l.b16 %v456
        %v517 = vunpack.c.l.b16 %v457
        %v518 = vunpack.c.l.b16 %v458
        %v519 = vunpack.c.l.b16 %v459
        %v520 = vunpack.c.l.b16 %v460
        %v521 = vunpack.c.l.b16 %v461
        %v522 = vunpack.c.l.b16 %v462
        %v523 = vunpack.c.l.b16 %v463
        %v524 = vunpack.c.l.b16 %v464
        %v525 = vunpack.c.l.b16 %v465
        %v526 = vunpack.c.l.b16 %v466
        %v527 = vunpack.c.l.b16 %v467
        %v528 = vunpack.c.l.b16 %v468
        %v529 = vunpack.c.l.b16 %v469
        %v530 = vunpack.c.l.b16 %v470
        %v531 = vunpack.c.l.b16 %v471
        %v532 = vpack.c.b16 %v517, %v516
        %v533 = vpack.c.b16 %v519, %v518
        %v534 = vpack.c.b16 %v521, %v520
        %v535 = vpack.c.b16 %v523, %v522
        %v536 = vpack.c.b16 %v525, %v524
        %v537 = vpack.c.b16 %v527, %v526
        %v538 = vpack.c.b16 %v529, %v528
        %v539 = vpack.c.b16 %v531, %v530
        %548 = vmatpush.bf16.msra.mxu0 %v539
        %549 = vmatpush.bf16.msra.mxu0 %v538
        %550 = vmatpush.bf16.msra.mxu0 %v537
        %551 = vmatpush.bf16.msra.mxu0 %v536
        %552 = vmatpush.bf16.msra.mxu0 %v535
        %553 = vmatpush.bf16.msra.mxu0 %v534
        %554 = vmatpush.bf16.msra.mxu0 %v533
        %555 = vmatpush.bf16.msra.mxu0 %v532
        %556 = vmatmul.bf16.gmra.mxu0 %v492
        %v557 = vpop.f32.mrf.mxu0
        %v558 = vadd.f32 %v474, %v557
        %v559 = vpop.f32.mrf.mxu0
        %v560 = vadd.f32 %v474, %v559
        %561 = vmatmul.bf16.gmra.mxu0 %v493
        %v562 = vpop.f32.mrf.mxu0
        %v563 = vadd.f32 %v474, %v562
        %v564 = vpop.f32.mrf.mxu0
        %v565 = vadd.f32 %v474, %v564
        %566 = vmatmul.bf16.gmra.mxu0 %v494
        %v567 = vpop.f32.mrf.mxu0
        %v568 = vadd.f32 %v474, %v567
        %v569 = vpop.f32.mrf.mxu0
        %v570 = vadd.f32 %v474, %v569
        %571 = vmatmul.bf16.gmra.mxu0 %v495
        %v572 = vpop.f32.mrf.mxu0
        %v573 = vadd.f32 %v474, %v572
        %v574 = vpop.f32.mrf.mxu0
        %v575 = vadd.f32 %v474, %v574
        %576 = vdwg.mxu0
        %vm577 = vcmp.gt.f32.partialorder %v558, 0.0
        %vm578 = vcmp.gt.f32.partialorder %v560, 0.0
        %vm579 = vcmp.gt.f32.partialorder %v563, 0.0
        %vm580 = vcmp.gt.f32.partialorder %v565, 0.0
        %vm581 = vcmp.gt.f32.partialorder %v568, 0.0
        %vm582 = vcmp.gt.f32.partialorder %v570, 0.0
        %vm583 = vcmp.gt.f32.partialorder %v573, 0.0
        %vm584 = vcmp.gt.f32.partialorder %v575, 0.0
        %v585 = vmin.f32 %v558, 0.0
        %v586 = vmin.f32 %v560, 0.0
        %v587 = vmin.f32 %v563, 0.0
        %v588 = vmin.f32 %v565, 0.0
        %v589 = vmin.f32 %v568, 0.0
        %v590 = vmin.f32 %v570, 0.0
        %v591 = vmin.f32 %v573, 0.0
        %v592 = vmin.f32 %v575, 0.0
        %v593 = vmul.f32 %v585, 1.442695
        %v594 = vpow.pop %v593
        %v595 = vmul.f32 %v586, 1.442695
        %v596 = vpow.pop %v595
        %v597 = vmul.f32 %v587, 1.442695
        %v598 = vpow.pop %v597
        %v599 = vmul.f32 %v588, 1.442695
        %v600 = vpow.pop %v599
        %v601 = vmul.f32 %v589, 1.442695
        %v602 = vpow.pop %v601
        %v603 = vmul.f32 %v590, 1.442695
        %v604 = vpow.pop %v603
        %v605 = vmul.f32 %v591, 1.442695
        %v606 = vpow.pop %v605
        %v607 = vmul.f32 %v592, 1.442695
        %v608 = vpow.pop %v607
        %v609 = vsub.f32 %v594, 1.0
        %v610 = vsub.f32 %v596, 1.0
        %v611 = vsub.f32 %v598, 1.0
        %v612 = vsub.f32 %v600, 1.0
        %v613 = vsub.f32 %v602, 1.0
        %v614 = vsub.f32 %v604, 1.0
        %v615 = vsub.f32 %v606, 1.0
        %v616 = vsub.f32 %v608, 1.0
        %v617 = vsel %vm577, %v558, %v609
        %v618 = vsel %vm578, %v560, %v610
        %v619 = vsel %vm579, %v563, %v611
        %v620 = vsel %vm580, %v565, %v612
        %v621 = vsel %vm581, %v568, %v613
        %v622 = vsel %vm582, %v570, %v614
        %v623 = vsel %vm583, %v573, %v615
        %v624 = vsel %vm584, %v575, %v616
        %v625 = vld [vmem:[#allocation2] sm:$0x1]
        %v626 = vld [vmem:[%s4] sm:$0x1]
        %v627 = vadd.f32 %v617, %v618
        %v628 = vadd.f32 %v627, %v619
        %v629 = vadd.f32 %v628, %v620
        %v630 = vadd.f32 %v629, %v621
        %v631 = vadd.f32 %v630, %v622
        %v632 = vadd.f32 %v631, %v623
        %v633 = vadd.f32 %v632, %v624
        %v634 = vrot.slane %v633, 4
        %v635 = vadd.f32 %v633, %v634
        %v636 = vrot.slane %v635, 2
        %v637 = vadd.f32 %v635, %v636
        %v638 = vrot.slane %v637, 1
        %v639 = vadd.f32 %v637, %v638
        %v640 = vmul.f32 %v617, %v617
        %v641 = vmul.f32 %v618, %v618
        %v642 = vmul.f32 %v619, %v619
        %v643 = vmul.f32 %v620, %v620
        %v644 = vmul.f32 %v621, %v621
        %v645 = vmul.f32 %v622, %v622
        %v646 = vmul.f32 %v623, %v623
        %v647 = vmul.f32 %v624, %v624
        %v648 = vadd.f32 %v640, %v641
        %v649 = vadd.f32 %v648, %v642
        %v650 = vadd.f32 %v649, %v643
        %v651 = vadd.f32 %v650, %v644
        %v652 = vadd.f32 %v651, %v645
        %v653 = vadd.f32 %v652, %v646
        %v654 = vadd.f32 %v653, %v647
        %v655 = vrot.slane %v654, 4
        %v656 = vadd.f32 %v654, %v655
        %v657 = vrot.slane %v656, 2
        %v658 = vadd.f32 %v656, %v657
        %v659 = vrot.slane %v658, 1
        %v660 = vadd.f32 %v658, %v659
        %661 = vmatpush.msra.mxu0 %v447
        %662 = vmatpush.msra.mxu0 %v446
        %663 = vmatpush.msra.mxu0 %v445
        %664 = vmatpush.msra.mxu0 %v444
        %665 = vmatpush.msra.mxu0 %v443
        %666 = vmatpush.msra.mxu0 %v442
        %667 = vmatpush.msra.mxu0 %v441
        %668 = vmatpush.msra.mxu0 %v440
        %669 = vmatpush.msra.mxu0 %v439
        %670 = vmatpush.msra.mxu0 %v438
        %671 = vmatpush.msra.mxu0 %v437
        %672 = vmatpush.msra.mxu0 %v436
        %673 = vmatpush.msra.mxu0 %v435
        %674 = vmatpush.msra.mxu0 %v434
        %675 = vmatpush.msra.mxu0 %v433
        %676 = vmatpush.msra.mxu0 %v432
        %677 = vmatmul.f32.gmra.mxu0 %v639
        %v678 = vpop.f32.mrf.mxu0
        %v679 = vadd.f32 0.0, %v678
        %680 = vdwg.mxu0
        %681 = vmatpush.msra.mxu0 %v447
        %682 = vmatpush.msra.mxu0 %v446
        %683 = vmatpush.msra.mxu0 %v445
        %684 = vmatpush.msra.mxu0 %v444
        %685 = vmatpush.msra.mxu0 %v443
        %686 = vmatpush.msra.mxu0 %v442
        %687 = vmatpush.msra.mxu0 %v441
        %688 = vmatpush.msra.mxu0 %v440
        %689 = vmatpush.msra.mxu0 %v439
        %690 = vmatpush.msra.mxu0 %v438
        %691 = vmatpush.msra.mxu0 %v437
        %692 = vmatpush.msra.mxu0 %v436
        %693 = vmatpush.msra.mxu0 %v435
        %694 = vmatpush.msra.mxu0 %v434
        %695 = vmatpush.msra.mxu0 %v433
        %696 = vmatpush.msra.mxu0 %v432
        %697 = vmatmul.f32.gmra.mxu0 %v660
        %v698 = vpop.f32.mrf.mxu0
        %v699 = vadd.f32 0.0, %v698
        %700 = vdwg.mxu0
        %v701 = vmul.f32 %v679, %v679
        %v702 = vsub.f32 %v699, %v701
        %v703 = vmax.f32 %v702, 0.0
        %v704 = vadd.f32 %v703, 1e-05
        %v705 = vrsqrt.pop %v704
        %v706 = vmul.f32 %v705, %v704
        %v707 = vmul.f32 %v706, %v705
        %v708 = vmul.f32 0.5, %v707
        %v709 = vsub.f32 1.5, %v708
        %v710 = vmul.f32 %v705, %v709
        %vm711 = vweird.f32 %v704
        %vm712 = vweird.f32 %v705
        %vm713 = vmor %vm711, %vm712
        %v714 = vsel %vm713, %v705, %v710
        %v715 = vmul.f32 %v714, %v625
        %v716 = vmul.f32 %v679, %v715
        %v717 = vsub.f32 %v626, %v716
        %v718 = vperm.slane %v715, 0
        %v719 = vmul.f32 %v617, %v718
        %v720 = vmul.f32 %v618, %v718
        %v721 = vmul.f32 %v619, %v718
        %v722 = vmul.f32 %v620, %v718
        %v723 = vmul.f32 %v621, %v718
        %v724 = vmul.f32 %v622, %v718
        %v725 = vmul.f32 %v623, %v718
        %v726 = vmul.f32 %v624, %v718
        %v728 = vperm.slane %v717, 0
        %v730 = vadd.f32 %v719, %v728
        %v731 = vadd.f32 %v720, %v728
        %v732 = vadd.f32 %v721, %v728
        %v733 = vadd.f32 %v722, %v728
        %v734 = vadd.f32 %v723, %v728
        %v735 = vadd.f32 %v724, %v728
        %v736 = vadd.f32 %v725, %v728
        %v737 = vadd.f32 %v726, %v728
        %v738 = vpack.c.bf16 %v731, %v730
        %v739 = vpack.c.bf16 %v733, %v732
        %v740 = vpack.c.bf16 %v735, %v734
        %v741 = vpack.c.bf16 %v737, %v736
        %v742 = vld [vmem:[%s5] sm:$0xf]
        %v743 = vld [vmem:[%s5 + $0x4] sm:$0xf]
        %v744 = vld [vmem:[%s5 + $0x8] sm:$0xf]
        %v745 = vld [vmem:[%s5 + $0xc] sm:$0xf]
        %v746 = vld [vmem:[%s5 + $0x10] sm:$0xf]
        %v747 = vld [vmem:[%s5 + $0x14] sm:$0xf]
        %v748 = vld [vmem:[%s5 + $0x18] sm:$0xf]
        %v749 = vld [vmem:[%s5 + $0x1c] sm:$0xf]
        %v750 = vld [vmem:[%s5 + $0x20] sm:$0xf]
        %v751 = vld [vmem:[%s5 + $0x24] sm:$0xf]
        %v752 = vld [vmem:[%s5 + $0x28] sm:$0xf]
        %v753 = vld [vmem:[%s5 + $0x2c] sm:$0xf]
        %v754 = vld [vmem:[%s5 + $0x30] sm:$0xf]
        %v755 = vld [vmem:[%s5 + $0x34] sm:$0xf]
        %v756 = vld [vmem:[%s5 + $0x38] sm:$0xf]
        %v757 = vld [vmem:[%s5 + $0x3c] sm:$0xf]
        %v758 = vld [vmem:[%s6] sm:$0x1]
        %v760 = vperm.slane %v758, 0
        %v778 = vunpack.c.l.b16 %v742
        %v779 = vunpack.c.l.b16 %v743
        %v780 = vunpack.c.l.b16 %v744
        %v781 = vunpack.c.l.b16 %v745
        %v782 = vunpack.c.l.b16 %v746
        %v783 = vunpack.c.l.b16 %v747
        %v784 = vunpack.c.l.b16 %v748
        %v785 = vunpack.c.l.b16 %v749
        %v786 = vunpack.c.l.b16 %v750
        %v787 = vunpack.c.l.b16 %v751
        %v788 = vunpack.c.l.b16 %v752
        %v789 = vunpack.c.l.b16 %v753
        %v790 = vunpack.c.l.b16 %v754
        %v791 = vunpack.c.l.b16 %v755
        %v792 = vunpack.c.l.b16 %v756
        %v793 = vunpack.c.l.b16 %v757
        %v794 = vpack.c.b16 %v779, %v778
        %v795 = vpack.c.b16 %v781, %v780
        %v796 = vpack.c.b16 %v783, %v782
        %v797 = vpack.c.b16 %v785, %v784
        %v798 = vpack.c.b16 %v787, %v786
        %v799 = vpack.c.b16 %v789, %v788
        %v800 = vpack.c.b16 %v791, %v790
        %v801 = vpack.c.b16 %v793, %v792
        %810 = vmatpush.bf16.msra.mxu0 %v801
        %811 = vmatpush.bf16.msra.mxu0 %v800
        %812 = vmatpush.bf16.msra.mxu0 %v799
        %813 = vmatpush.bf16.msra.mxu0 %v798
        %814 = vmatpush.bf16.msra.mxu0 %v797
        %815 = vmatpush.bf16.msra.mxu0 %v796
        %816 = vmatpush.bf16.msra.mxu0 %v795
        %817 = vmatpush.bf16.msra.mxu0 %v794
        %818 = vmatmul.bf16.gmra.mxu0 %v738
        %v819 = vpop.f32.mrf.mxu0
        %v820 = vadd.f32 %v760, %v819
        %v821 = vpop.f32.mrf.mxu0
        %v822 = vadd.f32 %v760, %v821
        %823 = vmatmul.bf16.gmra.mxu0 %v739
        %v824 = vpop.f32.mrf.mxu0
        %v825 = vadd.f32 %v760, %v824
        %v826 = vpop.f32.mrf.mxu0
        %v827 = vadd.f32 %v760, %v826
        %828 = vmatmul.bf16.gmra.mxu0 %v740
        %v829 = vpop.f32.mrf.mxu0
        %v830 = vadd.f32 %v760, %v829
        %v831 = vpop.f32.mrf.mxu0
        %v832 = vadd.f32 %v760, %v831
        %833 = vmatmul.bf16.gmra.mxu0 %v741
        %v834 = vpop.f32.mrf.mxu0
        %v835 = vadd.f32 %v760, %v834
        %v836 = vpop.f32.mrf.mxu0
        %v837 = vadd.f32 %v760, %v836
        %838 = vdwg.mxu0
        %vm839 = vcmp.gt.f32.partialorder %v820, 0.0
        %vm840 = vcmp.gt.f32.partialorder %v822, 0.0
        %vm841 = vcmp.gt.f32.partialorder %v825, 0.0
        %vm842 = vcmp.gt.f32.partialorder %v827, 0.0
        %vm843 = vcmp.gt.f32.partialorder %v830, 0.0
        %vm844 = vcmp.gt.f32.partialorder %v832, 0.0
        %vm845 = vcmp.gt.f32.partialorder %v835, 0.0
        %vm846 = vcmp.gt.f32.partialorder %v837, 0.0
        %v847 = vmin.f32 %v820, 0.0
        %v848 = vmin.f32 %v822, 0.0
        %v849 = vmin.f32 %v825, 0.0
        %v850 = vmin.f32 %v827, 0.0
        %v851 = vmin.f32 %v830, 0.0
        %v852 = vmin.f32 %v832, 0.0
        %v853 = vmin.f32 %v835, 0.0
        %v854 = vmin.f32 %v837, 0.0
        %v855 = vmul.f32 %v847, 1.442695
        %v856 = vpow.pop %v855
        %v857 = vmul.f32 %v848, 1.442695
        %v858 = vpow.pop %v857
        %v859 = vmul.f32 %v849, 1.442695
        %v860 = vpow.pop %v859
        %v861 = vmul.f32 %v850, 1.442695
        %v862 = vpow.pop %v861
        %v863 = vmul.f32 %v851, 1.442695
        %v864 = vpow.pop %v863
        %v865 = vmul.f32 %v852, 1.442695
        %v866 = vpow.pop %v865
        %v867 = vmul.f32 %v853, 1.442695
        %v868 = vpow.pop %v867
        %v869 = vmul.f32 %v854, 1.442695
        %v870 = vpow.pop %v869
        %v871 = vsub.f32 %v856, 1.0
        %v872 = vsub.f32 %v858, 1.0
        %v873 = vsub.f32 %v860, 1.0
        %v874 = vsub.f32 %v862, 1.0
        %v875 = vsub.f32 %v864, 1.0
        %v876 = vsub.f32 %v866, 1.0
        %v877 = vsub.f32 %v868, 1.0
        %v878 = vsub.f32 %v870, 1.0
        %v879 = vsel %vm839, %v820, %v871
        %v880 = vsel %vm840, %v822, %v872
        %v881 = vsel %vm841, %v825, %v873
        %v882 = vsel %vm842, %v827, %v874
        %v883 = vsel %vm843, %v830, %v875
        %v884 = vsel %vm844, %v832, %v876
        %v885 = vsel %vm845, %v835, %v877
        %v886 = vsel %vm846, %v837, %v878
        %v887 = vld [vmem:[%s7] sm:$0x1]
        %v888 = vld [vmem:[%s8] sm:$0x1]
        %v889 = vadd.f32 %v879, %v880
        %v890 = vadd.f32 %v889, %v881
        %v891 = vadd.f32 %v890, %v882
        %v892 = vadd.f32 %v891, %v883
        %v893 = vadd.f32 %v892, %v884
        %v894 = vadd.f32 %v893, %v885
        %v895 = vadd.f32 %v894, %v886
        %v896 = vrot.slane %v895, 4
        %v897 = vadd.f32 %v895, %v896
        %v898 = vrot.slane %v897, 2
        %v899 = vadd.f32 %v897, %v898
        %v900 = vrot.slane %v899, 1
        %v901 = vadd.f32 %v899, %v900
        %v902 = vmul.f32 %v879, %v879
        %v903 = vmul.f32 %v880, %v880
        %v904 = vmul.f32 %v881, %v881
        %v905 = vmul.f32 %v882, %v882
        %v906 = vmul.f32 %v883, %v883
        %v907 = vmul.f32 %v884, %v884
        %v908 = vmul.f32 %v885, %v885
        %v909 = vmul.f32 %v886, %v886
        %v910 = vadd.f32 %v902, %v903
        %v911 = vadd.f32 %v910, %v904
        %v912 = vadd.f32 %v911, %v905
        %v913 = vadd.f32 %v912, %v906
        %v914 = vadd.f32 %v913, %v907
        %v915 = vadd.f32 %v914, %v908
        %v916 = vadd.f32 %v915, %v909
        %v917 = vrot.slane %v916, 4
        %v918 = vadd.f32 %v916, %v917
        %v919 = vrot.slane %v918, 2
        %v920 = vadd.f32 %v918, %v919
        %v921 = vrot.slane %v920, 1
        %v922 = vadd.f32 %v920, %v921
        %923 = vmatpush.msra.mxu0 %v447
        %924 = vmatpush.msra.mxu0 %v446
        %925 = vmatpush.msra.mxu0 %v445
        %926 = vmatpush.msra.mxu0 %v444
        %927 = vmatpush.msra.mxu0 %v443
        %928 = vmatpush.msra.mxu0 %v442
        %929 = vmatpush.msra.mxu0 %v441
        %930 = vmatpush.msra.mxu0 %v440
        %931 = vmatpush.msra.mxu0 %v439
        %932 = vmatpush.msra.mxu0 %v438
        %933 = vmatpush.msra.mxu0 %v437
        %934 = vmatpush.msra.mxu0 %v436
        %935 = vmatpush.msra.mxu0 %v435
        %936 = vmatpush.msra.mxu0 %v434
        %937 = vmatpush.msra.mxu0 %v433
        %938 = vmatpush.msra.mxu0 %v432
        %939 = vmatmul.f32.gmra.mxu0 %v901
        %v940 = vpop.f32.mrf.mxu0
        %v941 = vadd.f32 0.0, %v940
        %942 = vdwg.mxu0
        %943 = vmatpush.msra.mxu0 %v447
        %944 = vmatpush.msra.mxu0 %v446
        %945 = vmatpush.msra.mxu0 %v445
        %946 = vmatpush.msra.mxu0 %v444
        %947 = vmatpush.msra.mxu0 %v443
        %948 = vmatpush.msra.mxu0 %v442
        %949 = vmatpush.msra.mxu0 %v441
        %950 = vmatpush.msra.mxu0 %v440
        %951 = vmatpush.msra.mxu0 %v439
        %952 = vmatpush.msra.mxu0 %v438
        %953 = vmatpush.msra.mxu0 %v437
        %954 = vmatpush.msra.mxu0 %v436
        %955 = vmatpush.msra.mxu0 %v435
        %956 = vmatpush.msra.mxu0 %v434
        %957 = vmatpush.msra.mxu0 %v433
        %958 = vmatpush.msra.mxu0 %v432
        %959 = vmatmul.f32.gmra.mxu0 %v922
        %v960 = vpop.f32.mrf.mxu0
        %v961 = vadd.f32 0.0, %v960
        %962 = vdwg.mxu0
        %v963 = vmul.f32 %v941, %v941
        %v964 = vsub.f32 %v961, %v963
        %v965 = vmax.f32 %v964, 0.0
        %v966 = vadd.f32 %v965, 1e-05
        %v967 = vrsqrt.pop %v966
        %v968 = vmul.f32 %v967, %v966
        %v969 = vmul.f32 %v968, %v967
        %v970 = vmul.f32 0.5, %v969
        %v971 = vsub.f32 1.5, %v970
        %v972 = vmul.f32 %v967, %v971
        %vm973 = vweird.f32 %v966
        %vm974 = vweird.f32 %v967
        %vm975 = vmor %vm973, %vm974
        %v976 = vsel %vm975, %v967, %v972
        %v977 = vmul.f32 %v976, %v887
        %v978 = vmul.f32 %v941, %v977
        %v979 = vsub.f32 %v888, %v978
        %v980 = vperm.slane %v977, 0
        %v981 = vmul.f32 %v879, %v980
        %v982 = vmul.f32 %v880, %v980
        %v983 = vmul.f32 %v881, %v980
        %v984 = vmul.f32 %v882, %v980
        %v985 = vmul.f32 %v883, %v980
        %v986 = vmul.f32 %v884, %v980
        %v987 = vmul.f32 %v885, %v980
        %v988 = vmul.f32 %v886, %v980
        %v990 = vperm.slane %v979, 0
        %v992 = vadd.f32 %v981, %v990
        %v993 = vadd.f32 %v982, %v990
        %v994 = vadd.f32 %v983, %v990
        %v995 = vadd.f32 %v984, %v990
        %v996 = vadd.f32 %v985, %v990
        %v997 = vadd.f32 %v986, %v990
        %v998 = vadd.f32 %v987, %v990
        %v999 = vadd.f32 %v988, %v990
        %v1000 = vpack.c.bf16 %v993, %v992
        %v1001 = vpack.c.bf16 %v995, %v994
        %v1002 = vpack.c.bf16 %v997, %v996
        %v1003 = vpack.c.bf16 %v999, %v998
        %v1004 = vld [vmem:[%s9] sm:$0xf]
        %v1005 = vld [vmem:[%s9 + $0x4] sm:$0xf]
        %v1006 = vld [vmem:[%s9 + $0x8] sm:$0xf]
        %v1007 = vld [vmem:[%s9 + $0xc] sm:$0xf]
        %v1008 = vld [vmem:[%s9 + $0x10] sm:$0xf]
        %v1009 = vld [vmem:[%s9 + $0x14] sm:$0xf]
        %v1010 = vld [vmem:[%s9 + $0x18] sm:$0xf]
        %v1011 = vld [vmem:[%s9 + $0x1c] sm:$0xf]
        %v1012 = vld [vmem:[%s9 + $0x20] sm:$0xf]
        %v1013 = vld [vmem:[%s9 + $0x24] sm:$0xf]
        %v1014 = vld [vmem:[%s9 + $0x28] sm:$0xf]
        %v1015 = vld [vmem:[%s9 + $0x2c] sm:$0xf]
        %v1016 = vld [vmem:[%s9 + $0x30] sm:$0xf]
        %v1017 = vld [vmem:[%s9 + $0x34] sm:$0xf]
        %v1018 = vld [vmem:[%s9 + $0x38] sm:$0xf]
        %v1019 = vld [vmem:[%s9 + $0x3c] sm:$0xf]
        %v1020 = vld [vmem:[%s10] sm:$0x1]
        %v1022 = vperm.slane %v1020, 0
        %v1040 = vunpack.c.l.b16 %v1004
        %v1041 = vunpack.c.l.b16 %v1005
        %v1042 = vunpack.c.l.b16 %v1006
        %v1043 = vunpack.c.l.b16 %v1007
        %v1044 = vunpack.c.l.b16 %v1008
        %v1045 = vunpack.c.l.b16 %v1009
        %v1046 = vunpack.c.l.b16 %v1010
        %v1047 = vunpack.c.l.b16 %v1011
        %v1048 = vunpack.c.l.b16 %v1012
        %v1049 = vunpack.c.l.b16 %v1013
        %v1050 = vunpack.c.l.b16 %v1014
        %v1051 = vunpack.c.l.b16 %v1015
        %v1052 = vunpack.c.l.b16 %v1016
        %v1053 = vunpack.c.l.b16 %v1017
        %v1054 = vunpack.c.l.b16 %v1018
        %v1055 = vunpack.c.l.b16 %v1019
        %v1056 = vpack.c.b16 %v1041, %v1040
        %v1057 = vpack.c.b16 %v1043, %v1042
        %v1058 = vpack.c.b16 %v1045, %v1044
        %v1059 = vpack.c.b16 %v1047, %v1046
        %v1060 = vpack.c.b16 %v1049, %v1048
        %v1061 = vpack.c.b16 %v1051, %v1050
        %v1062 = vpack.c.b16 %v1053, %v1052
        %v1063 = vpack.c.b16 %v1055, %v1054
        %1072 = vmatpush.bf16.msra.mxu0 %v1063
        %1073 = vmatpush.bf16.msra.mxu0 %v1062
        %1074 = vmatpush.bf16.msra.mxu0 %v1061
        %1075 = vmatpush.bf16.msra.mxu0 %v1060
        %1076 = vmatpush.bf16.msra.mxu0 %v1059
        %1077 = vmatpush.bf16.msra.mxu0 %v1058
        %1078 = vmatpush.bf16.msra.mxu0 %v1057
        %1079 = vmatpush.bf16.msra.mxu0 %v1056
        %1080 = vmatmul.bf16.gmra.mxu0 %v1000
        %v1081 = vpop.f32.mrf.mxu0
        %v1082 = vadd.f32 %v1022, %v1081
        %v1083 = vpop.f32.mrf.mxu0
        %v1084 = vadd.f32 %v1022, %v1083
        %1085 = vmatmul.bf16.gmra.mxu0 %v1001
        %v1086 = vpop.f32.mrf.mxu0
        %v1087 = vadd.f32 %v1022, %v1086
        %v1088 = vpop.f32.mrf.mxu0
        %v1089 = vadd.f32 %v1022, %v1088
        %1090 = vmatmul.bf16.gmra.mxu0 %v1002
        %v1091 = vpop.f32.mrf.mxu0
        %v1092 = vadd.f32 %v1022, %v1091
        %v1093 = vpop.f32.mrf.mxu0
        %v1094 = vadd.f32 %v1022, %v1093
        %1095 = vmatmul.bf16.gmra.mxu0 %v1003
        %v1096 = vpop.f32.mrf.mxu0
        %v1097 = vadd.f32 %v1022, %v1096
        %v1098 = vpop.f32.mrf.mxu0
        %v1099 = vadd.f32 %v1022, %v1098
        %1100 = vdwg.mxu0
        %v1101 = vmax.f32 %v1082, 0.0
        %v1102 = vmax.f32 %v1084, 0.0
        %v1103 = vmax.f32 %v1087, 0.0
        %v1104 = vmax.f32 %v1089, 0.0
        %v1105 = vmax.f32 %v1092, 0.0
        %v1106 = vmax.f32 %v1094, 0.0
        %v1107 = vmax.f32 %v1097, 0.0
        %v1108 = vmax.f32 %v1099, 0.0
        %v1109 = vand.u32 2147483647, %v1082
        %v1110 = vand.u32 2147483647, %v1084
        %v1111 = vand.u32 2147483647, %v1087
        %v1112 = vand.u32 2147483647, %v1089
        %v1113 = vand.u32 2147483647, %v1092
        %v1114 = vand.u32 2147483647, %v1094
        %v1115 = vand.u32 2147483647, %v1097
        %v1116 = vand.u32 2147483647, %v1099
        %v1117 = vsub.f32 0.0, %v1109
        %v1118 = vsub.f32 0.0, %v1110
        %v1119 = vsub.f32 0.0, %v1111
        %v1120 = vsub.f32 0.0, %v1112
        %v1121 = vsub.f32 0.0, %v1113
        %v1122 = vsub.f32 0.0, %v1114
        %v1123 = vsub.f32 0.0, %v1115
        %v1124 = vsub.f32 0.0, %v1116
        %v1125 = vmul.f32 %v1117, 1.442695
        %v1126 = vpow.pop %v1125
        %v1127 = vmul.f32 %v1118, 1.442695
        %v1128 = vpow.pop %v1127
        %v1129 = vmul.f32 %v1119, 1.442695
        %v1130 = vpow.pop %v1129
        %v1131 = vmul.f32 %v1120, 1.442695
        %v1132 = vpow.pop %v1131
        %v1133 = vmul.f32 %v1121, 1.442695
        %v1134 = vpow.pop %v1133
        %v1135 = vmul.f32 %v1122, 1.442695
        %v1136 = vpow.pop %v1135
        %v1137 = vmul.f32 %v1123, 1.442695
        %v1138 = vpow.pop %v1137
        %v1139 = vmul.f32 %v1124, 1.442695
        %v1140 = vpow.pop %v1139
        %v1141 = vadd.f32 %v1126, 1.0
        %v1142 = vlog2.pop %v1141
        %v1143 = vmul.f32 %v1142, 0.6931472
        %v1144 = vmul.f32 -0.5, %v1126
        %v1145 = vadd.f32 %v1144, 1.0
        %v1146 = vmul.f32 %v1145, %v1126
        %v1147 = vand.u32 2147483647, %v1126
        %vm1148 = vcmp.lt.f32.partialorder %v1147, 0.0004427343
        %v1149 = vsel %vm1148, %v1146, %v1143
        %v1150 = vadd.f32 %v1128, 1.0
        %v1151 = vlog2.pop %v1150
        %v1152 = vmul.f32 %v1151, 0.6931472
        %v1153 = vmul.f32 -0.5, %v1128
        %v1154 = vadd.f32 %v1153, 1.0
        %v1155 = vmul.f32 %v1154, %v1128
        %v1156 = vand.u32 2147483647, %v1128
        %vm1157 = vcmp.lt.f32.partialorder %v1156, 0.0004427343
        %v1158 = vsel %vm1157, %v1155, %v1152
        %v1159 = vadd.f32 %v1130, 1.0
        %v1160 = vlog2.pop %v1159
        %v1161 = vmul.f32 %v1160, 0.6931472
        %v1162 = vmul.f32 -0.5, %v1130
        %v1163 = vadd.f32 %v1162, 1.0
        %v1164 = vmul.f32 %v1163, %v1130
        %v1165 = vand.u32 2147483647, %v1130
        %vm1166 = vcmp.lt.f32.partialorder %v1165, 0.0004427343
        %v1167 = vsel %vm1166, %v1164, %v1161
        %v1168 = vadd.f32 %v1132, 1.0
        %v1169 = vlog2.pop %v1168
        %v1170 = vmul.f32 %v1169, 0.6931472
        %v1171 = vmul.f32 -0.5, %v1132
        %v1172 = vadd.f32 %v1171, 1.0
        %v1173 = vmul.f32 %v1172, %v1132
        %v1174 = vand.u32 2147483647, %v1132
        %vm1175 = vcmp.lt.f32.partialorder %v1174, 0.0004427343
        %v1176 = vsel %vm1175, %v1173, %v1170
        %v1177 = vadd.f32 %v1134, 1.0
        %v1178 = vlog2.pop %v1177
        %v1179 = vmul.f32 %v1178, 0.6931472
        %v1180 = vmul.f32 -0.5, %v1134
        %v1181 = vadd.f32 %v1180, 1.0
        %v1182 = vmul.f32 %v1181, %v1134
        %v1183 = vand.u32 2147483647, %v1134
        %vm1184 = vcmp.lt.f32.partialorder %v1183, 0.0004427343
        %v1185 = vsel %vm1184, %v1182, %v1179
        %v1186 = vadd.f32 %v1136, 1.0
        %v1187 = vlog2.pop %v1186
        %v1188 = vmul.f32 %v1187, 0.6931472
        %v1189 = vmul.f32 -0.5, %v1136
        %v1190 = vadd.f32 %v1189, 1.0
        %v1191 = vmul.f32 %v1190, %v1136
        %v1192 = vand.u32 2147483647, %v1136
        %vm1193 = vcmp.lt.f32.partialorder %v1192, 0.0004427343
        %v1194 = vsel %vm1193, %v1191, %v1188
        %v1195 = vadd.f32 %v1138, 1.0
        %v1196 = vlog2.pop %v1195
        %v1197 = vmul.f32 %v1196, 0.6931472
        %v1198 = vmul.f32 -0.5, %v1138
        %v1199 = vadd.f32 %v1198, 1.0
        %v1200 = vmul.f32 %v1199, %v1138
        %v1201 = vand.u32 2147483647, %v1138
        %vm1202 = vcmp.lt.f32.partialorder %v1201, 0.0004427343
        %v1203 = vsel %vm1202, %v1200, %v1197
        %v1204 = vadd.f32 %v1140, 1.0
        %v1205 = vlog2.pop %v1204
        %v1206 = vmul.f32 %v1205, 0.6931472
        %v1207 = vmul.f32 -0.5, %v1140
        %v1208 = vadd.f32 %v1207, 1.0
        %v1209 = vmul.f32 %v1208, %v1140
        %v1210 = vand.u32 2147483647, %v1140
        %vm1211 = vcmp.lt.f32.partialorder %v1210, 0.0004427343
        %v1212 = vsel %vm1211, %v1209, %v1206
        %v1213 = vadd.f32 %v1101, %v1149
        %v1214 = vadd.f32 %v1102, %v1158
        %v1215 = vadd.f32 %v1103, %v1167
        %v1216 = vadd.f32 %v1104, %v1176
        %v1217 = vadd.f32 %v1105, %v1185
        %v1218 = vadd.f32 %v1106, %v1194
        %v1219 = vadd.f32 %v1107, %v1203
        %v1220 = vadd.f32 %v1108, %v1212
        %v1221 = vlaneseq
        %v1222 = vand.u32 %v1221, 127
        %vm1223 = vcmp.ge.s32.totalorder %v1222, 64
        %v1224 = vadd.f32 %v1213, 0.0001
        %v1225 = vadd.f32 %v1214, 0.0001
        %v1226 = vadd.f32 %v1215, 0.0001
        %v1227 = vadd.f32 %v1216, 0.0001
        %v1228 = vadd.f32 %v1217, 0.0001
        %v1229 = vadd.f32 %v1218, 0.0001
        %v1230 = vadd.f32 %v1219, 0.0001
        %v1231 = vadd.f32 %v1220, 0.0001
        %v1232 = vsel %vm1223, %v1224, %v1082
        %v1233 = vsel %vm1223, %v1225, %v1084
        %v1234 = vsel %vm1223, %v1226, %v1087
        %v1235 = vsel %vm1223, %v1227, %v1089
        %v1236 = vsel %vm1223, %v1228, %v1092
        %v1237 = vsel %vm1223, %v1229, %v1094
        %v1238 = vsel %vm1223, %v1230, %v1097
        %v1239 = vsel %vm1223, %v1231, %v1099
        %1240 = vst [vmem:[%s430] sm:$0xff] %v1232
        %1241 = vst [vmem:[%s430 + $0x8] sm:$0xff] %v1233
        %1242 = vst [vmem:[%s430 + $0x10] sm:$0xff] %v1234
        %1243 = vst [vmem:[%s430 + $0x18] sm:$0xff] %v1235
        %1244 = vst [vmem:[%s430 + $0x20] sm:$0xff] %v1236
        %1245 = vst [vmem:[%s430 + $0x28] sm:$0xff] %v1237
        %1246 = vst [vmem:[%s430 + $0x30] sm:$0xff] %v1238
        %1247 = vst [vmem:[%s430 + $0x38] sm:$0xff] %v1239
        %s1248 = smul.u32 8, %s24
        %p1249 = scmp.lt.s32.totalorder %s1248, 15
        %s1250 = scalar_select %p1249, %s1248, 15
        %s1251 = smul.addr %s1250, 8
        %s1252 = scalar_lea.vmem %s12, %s1251
        // Predicated region
        $region73: #{latent_post_disc.1} parent=67 // pred_check
          %p1253 = pneg %p299
        $region74: #{latent_post_disc.1} parent=67 // pred_check_branch
          %1255 = sbr.rel (%p1253) target = $region76
        $region75: #{latent_post_disc.1} parent=67 // pred_region
          %s1256 = smul.u32 8, %s24
        $region76: #{latent_post_disc.1} parent=67 // pred_fallthru
          _
      $region68: #{latent_post_disc.1} parent=5 // pred_fallthru
        _
      %p1257 = scmp.le.s32.totalorder 2, %s19
      // Predicated region
      $region77: #{latent_post_disc.1} parent=5 // pred_check
        %p1258 = pneg %p1257
      $region78: #{latent_post_disc.1} parent=5 // pred_check_branch
        %1260 = sbr.rel (%p1258) target = $region80
      $region79: #{latent_post_disc.1} parent=5 // pred_region
        %s1261 = ssub.s32 %s19, 2
        // Predicated region
        $region81: #{latent_post_disc.1} parent=79 // pred_check
          %p1262 = pneg %p305
        $region82: #{latent_post_disc.1} parent=79 // pred_check_branch
          %1264 = sbr.rel (%p1262) target = $region84
        $region83: #{latent_post_disc.1} parent=79 // pred_region
          %s1265 = smul.u32 8, %s25
          %p1266 = scmp.lt.s32.totalorder %s1265, 15
          %s1267 = scalar_select %p1266, %s1265, 15
          %s1268 = smul.addr %s1267, 8
          %s1269 = scalar_lea.vmem %s12, %s1268
        $region84: #{latent_post_disc.1} parent=79 // pred_fallthru
          _
      $region80: #{latent_post_disc.1} parent=5 // pred_fallthru
        _
    $region6: #{latent_post_disc.1} parent=1 // loop_footer
      %s23 = sadd.s32 1, %s19
    $region7: #{latent_post_disc.1} parent=1 // loop_footer_branch
      %18 = sbr.rel target = $region3
    $region8: #{latent_post_disc.1} parent=1 // loop_exit
      _
    %1270 = vsyncpa [#allocation3], 1
    %s1271 = scalar_lea.sflag [#allocation3], 1
    %1272 = vsyncpa %s1271, 1

</llo_original>
